<compile_context>
chip_gen: v5e
topology: v5e:2x2
jax: 0.10.0
libtpu: 0.0.40
codegen_flags: <defaults>
</compile_context>

<pallas_src>
import jax
import jax.numpy as jnp
from jax.experimental import pallas as pl
from jax.experimental.pallas import tpu as pltpu


# --------------------------------------------------------------------------
# Kernels
# --------------------------------------------------------------------------

def residual_mlp_kernel_resident(x_ref, w1_ref, b1_ref, w2_ref, b2_ref, o_ref):
    """Grid: (row tiles,). Weights are VMEM-resident (constant index_maps)."""
    x = x_ref[...]                                           # (TM, D) f32
    h = jnp.dot(x.astype(jnp.bfloat16), w1_ref[...],
                preferred_element_type=jnp.float32)          # (TM, H) f32
    h = jax.nn.gelu(h + b1_ref[...], approximate=True)       # f32 VPU + EUP
    y = jnp.dot(h.astype(jnp.bfloat16), w2_ref[...],
                preferred_element_type=jnp.float32)          # (TM, D) f32
    # fn(x) + x : bias + residual, single lane-dense store.
    o_ref[...] = (y + b2_ref[...] + x).astype(o_ref.dtype)


def residual_mlp_kernel_chunked(x_ref, w1_ref, b1_ref, w2_ref, b2_ref, o_ref,
                                xb_ref):
    """Grid: (row tiles, H chunks). Used only when weights don't fit in VMEM.

    Accumulates directly into the resident o_ref block; bias b2 and the
    residual are folded into the j==0 init; x->bf16 cast is hoisted to j==0.
    """
    j = pl.program_id(1)

    @pl.when(j == 0)
    def _init():
        x = x_ref[...]                                       # (TM, D) f32
        xb_ref[...] = x.astype(jnp.bfloat16)                 # hoisted cast
        o_ref[...] = x + b2_ref[...]                         # residual + b2

    h = jnp.dot(xb_ref[...], w1_ref[...],
                preferred_element_type=jnp.float32)          # (TM, TH) f32
    h = jax.nn.gelu(h + b1_ref[...], approximate=True)
    o_ref[...] += jnp.dot(h.astype(jnp.bfloat16), w2_ref[...],
                          preferred_element_type=jnp.float32)


# --------------------------------------------------------------------------
# Wrapper
# --------------------------------------------------------------------------

_MIB = 1024 * 1024
# Keep well under v7x's 64 MiB physical VMEM (smallest generation).
_RESIDENT_WEIGHT_BUDGET = 40 * _MIB


def _pick_tm(m):
    """Largest row tile (<=1024, mult. of 8) dividing m, preferring >=2 tiles."""
    for c in (1024, 512, 256, 128, 64, 32, 16, 8):
        if m % c == 0 and m // c >= 2:
            return c
    for c in (1024, 512, 256, 128, 64, 32, 16, 8):
        if m % c == 0:
            return c
    return m


def _pick_th(h):
    for c in (256, 128):
        if h % c == 0:
            return c
    return h


def residual_mlp(x, w1, b1, w2, b2):
    """out = GELU(x @ w1 + b1) @ w2 + b2 + x, fused in one Pallas kernel.

    x: (B, S, D) float32.  Returns (B, S, D) float32.
    """
    B, S, D = x.shape
    H = w1.shape[1]
    M = B * S

    tm = _pick_tm(M)

    # TODO(synk): add cdiv-based grid + masking for shapes that do not tile
    # evenly by 8/128; demo shapes are chosen lane-dense and even.
    assert M % tm == 0, "row count must tile evenly by tm"
    assert D % 128 == 0, "model dim must be a multiple of 128"

    x2 = x.reshape(M, D)
    w1_bf = w1.astype(jnp.bfloat16)
    w2_bf = w2.astype(jnp.bfloat16)
    b1_2 = b1.reshape(1, H)
    b2_2 = b2.reshape(1, D)

    # Resident-weight VMEM estimate: bf16 weights + biases (once) +
    # double-buffered f32 x/out tiles.
    weight_bytes = 2 * D * H * 2 + (H + D) * 4
    act_bytes = 2 * (tm * D * 4) * 2          # x + out, double-buffered
    resident_bytes = weight_bytes + act_bytes

    if resident_bytes <= _RESIDENT_WEIGHT_BUDGET:
        # ---- preferred path: weights DMA'd once, stay VMEM-resident ----
        vmem_limit = min(64 * _MIB, max(16 * _MIB, int(resident_bytes * 1.5) + 4 * _MIB))
        out2 = pl.pallas_call(
            residual_mlp_kernel_resident,
            out_shape=jax.ShapeDtypeStruct((M, D), x.dtype),
            grid=(M // tm,),
            in_specs=[
                pl.BlockSpec((tm, D), lambda i: (i, 0)),   # x row tile
                pl.BlockSpec((D, H), lambda i: (0, 0)),    # w1 (resident)
                pl.BlockSpec((1, H), lambda i: (0, 0)),    # b1 (resident)
                pl.BlockSpec((H, D), lambda i: (0, 0)),    # w2 (resident)
                pl.BlockSpec((1, D), lambda i: (0, 0)),    # b2 (resident)
            ],
            out_specs=pl.BlockSpec((tm, D), lambda i: (i, 0)),
            compiler_params=pltpu.CompilerParams(
                dimension_semantics=("parallel",),
                vmem_limit_bytes=vmem_limit,
            ),
        )(x2, w1_bf, b1_2, w2_bf, b2_2)
    else:
        # ---- fallback: chunk H (reduction axis last), accumulate in o_ref ----
        th = _pick_th(H)
        assert H % th == 0, "hidden dim must tile evenly by th"
        chunk_bytes = (2 * (D * th * 2 + th * D * 2)      # double-buffered w chunks
                       + (H + D) * 4                      # biases
                       + 2 * (tm * D * 4) * 2             # x + out tiles
                       + tm * D * 2)                      # bf16 x scratch
        vmem_limit = min(64 * _MIB, max(16 * _MIB, int(chunk_bytes * 1.5) + 4 * _MIB))
        out2 = pl.pallas_call(
            residual_mlp_kernel_chunked,
            out_shape=jax.ShapeDtypeStruct((M, D), x.dtype),
            grid=(M // tm, H // th),
            in_specs=[
                pl.BlockSpec((tm, D), lambda i, j: (i, 0)),   # x (resident across j)
                pl.BlockSpec((D, th), lambda i, j: (0, j)),   # w1 H-chunk
                pl.BlockSpec((1, th), lambda i, j: (0, j)),   # b1 H-chunk
                pl.BlockSpec((th, D), lambda i, j: (j, 0)),   # w2 H-chunk
                pl.BlockSpec((1, D), lambda i, j: (0, 0)),    # b2
            ],
            out_specs=pl.BlockSpec((tm, D), lambda i, j: (i, 0)),
            scratch_shapes=[pltpu.VMEM((tm, D), jnp.bfloat16)],
            compiler_params=pltpu.CompilerParams(
                dimension_semantics=("parallel", "arbitrary"),
                vmem_limit_bytes=vmem_limit,
            ),
        )(x2, w1_bf, b1_2, w2_bf, b2_2)

    return out2.reshape(B, S, D)


# --------------------------------------------------------------------------
# References
# --------------------------------------------------------------------------

def residual_mlp_ref_f32(x, w1, b1, w2, b2):
    h = jax.nn.gelu(jnp.dot(x, w1) + b1, approximate=True)
    return jnp.dot(h, w2) + b2 + x


def residual_mlp_ref_bf16(x, w1, b1, w2, b2):
    # Matches kernel numerics: bf16 matmul operands, f32 accumulation,
    # f32 elementwise (bias / GELU / residual).
    h = jnp.dot(x.astype(jnp.bfloat16), w1.astype(jnp.bfloat16),
                preferred_element_type=jnp.float32) + b1
    h = jax.nn.gelu(h, approximate=True)
    y = jnp.dot(h.astype(jnp.bfloat16), w2.astype(jnp.bfloat16),
                preferred_element_type=jnp.float32)
    return y + b2 + x


if __name__ == "__main__":
    # Lane-dense demo shapes: batch=2, seq=512, dim=128, hidden=256.
    # M = 1024 rows -> tm = 512 (2 row tiles, both v7x TensorCores busy);
    # weights (bf16) ~128 KiB -> resident path.
    B, S, D, H = 2, 512, 128, 256
    key = jax.random.PRNGKey(0)
    kx, k1, k2, k3, k4 = jax.random.split(key, 5)

    x = jax.random.normal(kx, (B, S, D), dtype=jnp.float32)
    w1 = jax.random.normal(k1, (D, H), dtype=jnp.float32) * (1.0 / D ** 0.5)
    b1 = jax.random.normal(k2, (H,), dtype=jnp.float32) * 0.01
    w2 = jax.random.normal(k3, (H, D), dtype=jnp.float32) * (1.0 / H ** 0.5)
    b2 = jax.random.normal(k4, (D,), dtype=jnp.float32) * 0.01

    out = residual_mlp(x, w1, b1, w2, b2)
    out = jax.block_until_ready(out)

    assert out.shape == x.shape and out.dtype == x.dtype

    # Tight check vs a reference with matched bf16-operand numerics.
    ref_bf16 = residual_mlp_ref_bf16(x, w1, b1, w2, b2)
    assert jnp.allclose(out, ref_bf16, atol=2e-3, rtol=2e-3), \
        "mismatch vs bf16-matched reference"

    # Loose sanity check vs full-f32 (bf16 operand rounding only).
    ref_f32 = residual_mlp_ref_f32(x, w1, b1, w2, b2)
    assert jnp.allclose(out, ref_f32, atol=1e-1, rtol=1e-1), \
        "mismatch vs f32 reference"

    print("KERNEL_OK")
</pallas_src>

<mosaic_0001>
module attributes {stable_mosaic.version = 11 : i64} {
  func.func @residual_mlp_kernel_resident(%arg0: i32, %arg1: memref<512x128xf32, #tpu.memory_space<vmem>>, %arg2: memref<128x256xbf16, #tpu.memory_space<vmem>>, %arg3: memref<1x256xf32, #tpu.memory_space<vmem>>, %arg4: memref<256x128xbf16, #tpu.memory_space<vmem>>, %arg5: memref<1x128xf32, #tpu.memory_space<vmem>>, %arg6: memref<512x128xf32, #tpu.memory_space<vmem>>) attributes {dimension_semantics = [#tpu.dimension_semantics<parallel>], iteration_bounds = array<i64: 2>, scalar_prefetch = 0 : i64, scratch_operands = 0 : i64, tpu.core_type = #tpu.core_type<tc>, window_params = [{transform_indices = @transform_0, window_bounds = array<i64: 512, 128>}, {pipeline_mode = #tpu.pipeline_mode<synchronous>, transform_indices = @transform_1, window_bounds = array<i64: 128, 256>}, {pipeline_mode = #tpu.pipeline_mode<synchronous>, transform_indices = @transform_2, window_bounds = array<i64: 1, 256>}, {pipeline_mode = #tpu.pipeline_mode<synchronous>, transform_indices = @transform_3, window_bounds = array<i64: 256, 128>}, {pipeline_mode = #tpu.pipeline_mode<synchronous>, transform_indices = @transform_4, window_bounds = array<i64: 1, 128>}, {transform_indices = @transform_5, window_bounds = array<i64: 512, 128>}]} {
    %c0 = arith.constant 0 : index
    %c0_0 = arith.constant 0 : index
    %0 = vector.load %arg1[%c0, %c0_0] : memref<512x128xf32, #tpu.memory_space<vmem>>, vector<512x128xf32>
    %1 = arith.truncf %0 : vector<512x128xf32> to vector<512x128xbf16>
    %c0_1 = arith.constant 0 : index
    %c0_2 = arith.constant 0 : index
    %2 = vector.load %arg2[%c0_1, %c0_2] : memref<128x256xbf16, #tpu.memory_space<vmem>>, vector<128x256xbf16>
    %cst = arith.constant dense<0.000000e+00> : vector<512x256xf32>
    %3 = tpu.matmul %1, %2, %cst {dimension_numbers = #tpu.dot_dimension_numbers<[1], [0], [0], [1], [0, 0, 1, 1], [], []>} : vector<512x128xbf16>, vector<128x256xbf16>, vector<512x256xf32> -> vector<512x256xf32>
    %c0_3 = arith.constant 0 : index
    %c0_4 = arith.constant 0 : index
    %4 = vector.load %arg3[%c0_3, %c0_4] : memref<1x256xf32, #tpu.memory_space<vmem>>, vector<1x256xf32>
    %5 = vector.broadcast %4 : vector<1x256xf32> to vector<512x256xf32>
    %6 = arith.addf %3, %5 : vector<512x256xf32>
    %7 = arith.mulf %6, %6 : vector<512x256xf32>
    %8 = arith.mulf %6, %7 : vector<512x256xf32>
    %cst_5 = arith.constant 4.471500e-02 : f32
    %9 = vector.broadcast %cst_5 : f32 to vector<512x256xf32>
    %10 = arith.mulf %9, %8 : vector<512x256xf32>
    %11 = arith.addf %6, %10 : vector<512x256xf32>
    %cst_6 = arith.constant 0.797884583 : f32
    %12 = vector.broadcast %cst_6 : f32 to vector<512x256xf32>
    %13 = arith.mulf %12, %11 : vector<512x256xf32>
    %14 = math.tanh %13 : vector<512x256xf32>
    %cst_7 = arith.constant 1.000000e+00 : f32
    %15 = vector.broadcast %cst_7 : f32 to vector<512x256xf32>
    %16 = arith.addf %15, %14 : vector<512x256xf32>
    %cst_8 = arith.constant 5.000000e-01 : f32
    %17 = vector.broadcast %cst_8 : f32 to vector<512x256xf32>
    %18 = arith.mulf %17, %16 : vector<512x256xf32>
    %19 = arith.mulf %6, %18 : vector<512x256xf32>
    %20 = arith.truncf %19 : vector<512x256xf32> to vector<512x256xbf16>
    %c0_9 = arith.constant 0 : index
    %c0_10 = arith.constant 0 : index
    %21 = vector.load %arg4[%c0_9, %c0_10] : memref<256x128xbf16, #tpu.memory_space<vmem>>, vector<256x128xbf16>
    %cst_11 = arith.constant dense<0.000000e+00> : vector<512x128xf32>
    %22 = tpu.matmul %20, %21, %cst_11 {dimension_numbers = #tpu.dot_dimension_numbers<[1], [0], [0], [1], [0, 0, 1, 1], [], []>} : vector<512x256xbf16>, vector<256x128xbf16>, vector<512x128xf32> -> vector<512x128xf32>
    %c0_12 = arith.constant 0 : index
    %c0_13 = arith.constant 0 : index
    %23 = vector.load %arg5[%c0_12, %c0_13] : memref<1x128xf32, #tpu.memory_space<vmem>>, vector<1x128xf32>
    %24 = vector.broadcast %23 : vector<1x128xf32> to vector<512x128xf32>
    %25 = arith.addf %22, %24 : vector<512x128xf32>
    %26 = arith.addf %25, %0 : vector<512x128xf32>
    %c0_14 = arith.constant 0 : index
    %c0_15 = arith.constant 0 : index
    %27 = vector.load %arg6[%c0_14, %c0_15] : memref<512x128xf32, #tpu.memory_space<vmem>>, vector<512x128xf32>
    tpu.vector_store %arg6[%c0_14, %c0_15], %26 {strides = array<i32>} : memref<512x128xf32, #tpu.memory_space<vmem>>, vector<512x128xf32>,
    return
  }
  func.func @transform_0(%arg0: i32) -> (i32, i32) {
    %c0_i32 = arith.constant 0 : i32
    %c0_i32_0 = arith.constant 0 : i32
    return %arg0, %c0_i32 : i32, i32
  }
  func.func @transform_1(%arg0: i32) -> (i32, i32) {
    %c0_i32 = arith.constant 0 : i32
    %c0_i32_0 = arith.constant 0 : i32
    %c0_i32_1 = arith.constant 0 : i32
    return %c0_i32, %c0_i32_0 : i32, i32
  }
  func.func @transform_2(%arg0: i32) -> (i32, i32) {
    %c0_i32 = arith.constant 0 : i32
    %c0_i32_0 = arith.constant 0 : i32
    %c0_i32_1 = arith.constant 0 : i32
    return %c0_i32, %c0_i32_0 : i32, i32
  }
  func.func @transform_3(%arg0: i32) -> (i32, i32) {
    %c0_i32 = arith.constant 0 : i32
    %c0_i32_0 = arith.constant 0 : i32
    %c0_i32_1 = arith.constant 0 : i32
    return %c0_i32, %c0_i32_0 : i32, i32
  }
  func.func @transform_4(%arg0: i32) -> (i32, i32) {
    %c0_i32 = arith.constant 0 : i32
    %c0_i32_0 = arith.constant 0 : i32
    %c0_i32_1 = arith.constant 0 : i32
    return %c0_i32, %c0_i32_0 : i32, i32
  }
  func.func @transform_5(%arg0: i32) -> (i32, i32) {
    %c0_i32 = arith.constant 0 : i32
    %c0_i32_0 = arith.constant 0 : i32
    return %arg0, %c0_i32 : i32, i32
  }
}

</mosaic_0001>

<llo_original>
// kernel: tpu_custom_call.1
$region0: #{tpu_custom_call.1}
  #allocation0 [shape = 'u32[]', space=smem, size = 0x4, offset = 0x4, fixed_abs, tag = 'smem constant byte address 0x4 - core index']
  #allocation1 [shape = 'u32[72,128]{1,0:T(1,128)}', space=vmem, size = 0x9000, scoped, tag = 'internal scratch']
  %s0 = inlined_call_operand.hbm [shape: f32[1024,128], index: 0, kind: input, shape index: {}]
  %s1 = inlined_call_operand.hbm [shape: bf16[128,256], index: 1, kind: input, shape index: {}]
  %s2 = inlined_call_operand.hbm [shape: f32[1,256], index: 2, kind: input, shape index: {}]
  %s3 = inlined_call_operand.hbm [shape: bf16[256,128], index: 3, kind: input, shape index: {}]
  %s4 = inlined_call_operand.vmem [shape: f32[1,128], index: 4, kind: input, shape index: {}]
  %s5 = inlined_call_operand.hbm [shape: f32[1024,128], index: 5, kind: output, shape index: {}]
  %s6 = sld [smem:[#allocation0]]
  $region69: #{tpu_custom_call.1} parent=0
    _
  %s8 = ssub.s32 1, %s6
  %s9 = scalar_select 0, %s8, %s6
  $region1: #{tpu_custom_call.1} parent=0
    #allocation2 [shape = 'u8[524288]{0}', space=vmem, size = 0x80000, scoped, tag = 'input window, operand 0']
    #allocation3 [shape = 's32[2]{0}', space=sflag, size = 0x8, scoped, tag = 'scoped memory for tpu_custom_call.1']
    #allocation4 [shape = 's32[2]{0}', space=sflag, size = 0x8, scoped, tag = 'scoped memory for tpu_custom_call.1']
    #allocation5 [shape = 'u8[65536]{0}', space=vmem, size = 0x10000, scoped, tag = 'input window, operand 1, single buffered']
    #allocation6 [shape = 's32[1]{0}', space=sflag, size = 0x4, scoped, tag = 'scoped memory for tpu_custom_call.1']
    #allocation7 [shape = 'u8[1024]{0}', space=vmem, size = 0x400, scoped, tag = 'input window, operand 2, single buffered']
    #allocation8 [shape = 'u8[65536]{0}', space=vmem, size = 0x10000, scoped, tag = 'input window, operand 3, single buffered']
    #allocation9 [shape = 's32[1]{0}', space=sflag, size = 0x4, scoped, tag = 'scoped memory for tpu_custom_call.1']
    #allocation10 [shape = 'u8[524288]{0}', space=vmem, size = 0x80000, scoped, tag = 'output window, operand 0']
    %10 = vsyncpa [#allocation3], 0
    %s11 = scalar_lea.sflag [#allocation3], 1
    %12 = vsyncpa %s11, 0
    %13 = vsyncpa [#allocation6], 0
    %14 = vsyncpa [#allocation9], 0
    %15 = vsyncpa [#allocation4], 0
    %s16 = scalar_lea.sflag [#allocation4], 1
    %17 = vsyncpa %s16, 0
    loop: start=0, step=1, limit=4
    $region2: #{tpu_custom_call.1} parent=1 // loop_pre_header
      _
    $region3: #{tpu_custom_call.1} parent=1 // loop_header
      %s19 = sphi 0, %s23
      %p20 = scmp.ge.s32.totalorder %s19, 4
      %s29 = sphi 0, %s31
      %s32 = sphi 0, %s29
      %s33 = sphi 0, %s32
      %s49 = sphi 0, %s33
      %s53 = sphi 0, %s53
      %s55 = sphi 0, %s53
      %s56 = sphi 0, %s55
      %s70 = sphi 0, %s56
      %s74 = sphi 0, %s74
      %s76 = sphi 0, %s74
      %s77 = sphi 0, %s76
      %s91 = sphi 0, %s77
      %s95 = sphi 0, %s95
      %s97 = sphi 0, %s95
      %s98 = sphi 0, %s97
      %s112 = sphi 0, %s98
      %s116 = sphi 0, %s116
      %s118 = sphi 0, %s116
      %s119 = sphi 0, %s118
      %s133 = sphi 0, %s119
      %s139 = sphi 0, %s141
      %s142 = sphi 0, %s139
      %s143 = sphi 0, %s142
      %s159 = sphi 0, %s143
    $region4: #{tpu_custom_call.1} parent=1 // loop_header_branch
      %22 = sbr.rel (%p20) target = $region8
    $region5: #{tpu_custom_call.1} parent=1 // loop_body
      %s24 = ssub.s32 %s19, 1
      %s25 = ssub.s32 %s19, 2
      %s26 = sadd.s32 %s19, 1
      %s27 = ssub.s32 %s19, %s26
      %p28 = scmp.eq.s32.totalorder %s27, 0
      %s30 = sadd.s32 %s29, 1
      %s31 = scalar_select %p28, %s29, %s30
      %p34 = pneg %p28
      %p35 = scmp.eq.s32.totalorder %s19, 1
      %p36 = por %p34, %p35
      %p37 = scmp.ne.s32.totalorder %s29, %s32
      %p38 = scmp.eq.s32.totalorder %s19, 0
      %p39 = por %p37, %p38
      %p40 = scmp.ne.s32.totalorder %s29, %s32
      %p41 = scmp.eq.s32.totalorder %s24, 1
      %p42 = por %p40, %p41
      %p43 = scmp.ne.s32.totalorder %s32, %s33
      %p44 = scmp.eq.s32.totalorder %s24, 0
      %p45 = por %p43, %p44
      %p46 = scmp.ne.s32.totalorder %s32, %s33
      %p47 = scmp.eq.s32.totalorder %s25, 1
      %p48 = por %p46, %p47
      %p50 = scmp.ne.s32.totalorder %s33, %s49
      %p51 = scmp.eq.s32.totalorder %s25, 0
      %p52 = por %p50, %p51
      %s54 = sadd.s32 %s53, 1
      %p57 = scmp.eq.s32.totalorder %s19, 1
      %p58 = scmp.ne.s32.totalorder %s53, %s55
      %p59 = scmp.eq.s32.totalorder %s19, 0
      %p60 = por %p58, %p59
      %p61 = scmp.ne.s32.totalorder %s53, %s55
      %p62 = scmp.eq.s32.totalorder %s24, 1
      %p63 = por %p61, %p62
      %p64 = scmp.ne.s32.totalorder %s55, %s56
      %p65 = scmp.eq.s32.totalorder %s24, 0
      %p66 = por %p64, %p65
      %p67 = scmp.ne.s32.totalorder %s55, %s56
      %p68 = scmp.eq.s32.totalorder %s25, 1
      %p69 = por %p67, %p68
      %p71 = scmp.ne.s32.totalorder %s56, %s70
      %p72 = scmp.eq.s32.totalorder %s25, 0
      %p73 = por %p71, %p72
      %s75 = sadd.s32 %s74, 1
      %p78 = scmp.eq.s32.totalorder %s19, 1
      %p79 = scmp.ne.s32.totalorder %s74, %s76
      %p80 = scmp.eq.s32.totalorder %s19, 0
      %p81 = por %p79, %p80
      %p82 = scmp.ne.s32.totalorder %s74, %s76
      %p83 = scmp.eq.s32.totalorder %s24, 1
      %p84 = por %p82, %p83
      %p85 = scmp.ne.s32.totalorder %s76, %s77
      %p86 = scmp.eq.s32.totalorder %s24, 0
      %p87 = por %p85, %p86
      %p88 = scmp.ne.s32.totalorder %s76, %s77
      %p89 = scmp.eq.s32.totalorder %s25, 1
      %p90 = por %p88, %p89
      %p92 = scmp.ne.s32.totalorder %s77, %s91
      %p93 = scmp.eq.s32.totalorder %s25, 0
      %p94 = por %p92, %p93
      %s96 = sadd.s32 %s95, 1
      %p99 = scmp.eq.s32.totalorder %s19, 1
      %p100 = scmp.ne.s32.totalorder %s95, %s97
      %p101 = scmp.eq.s32.totalorder %s19, 0
      %p102 = por %p100, %p101
      %p103 = scmp.ne.s32.totalorder %s95, %s97
      %p104 = scmp.eq.s32.totalorder %s24, 1
      %p105 = por %p103, %p104
      %p106 = scmp.ne.s32.totalorder %s97, %s98
      %p107 = scmp.eq.s32.totalorder %s24, 0
      %p108 = por %p106, %p107
      %p109 = scmp.ne.s32.totalorder %s97, %s98
      %p110 = scmp.eq.s32.totalorder %s25, 1
      %p111 = por %p109, %p110
      %p113 = scmp.ne.s32.totalorder %s98, %s112
      %p114 = scmp.eq.s32.totalorder %s25, 0
      %p115 = por %p113, %p114
      %s117 = sadd.s32 %s116, 1
      %p120 = scmp.eq.s32.totalorder %s19, 1
      %p121 = scmp.ne.s32.totalorder %s116, %s118
      %p122 = scmp.eq.s32.totalorder %s19, 0
      %p123 = por %p121, %p122
      %p124 = scmp.ne.s32.totalorder %s116, %s118
      %p125 = scmp.eq.s32.totalorder %s24, 1
      %p126 = por %p124, %p125
      %p127 = scmp.ne.s32.totalorder %s118, %s119
      %p128 = scmp.eq.s32.totalorder %s24, 0
      %p129 = por %p127, %p128
      %p130 = scmp.ne.s32.totalorder %s118, %s119
      %p131 = scmp.eq.s32.totalorder %s25, 1
      %p132 = por %p130, %p131
      %p134 = scmp.ne.s32.totalorder %s119, %s133
      %p135 = scmp.eq.s32.totalorder %s25, 0
      %p136 = por %p134, %p135
      %s137 = ssub.s32 %s19, %s26
      %p138 = scmp.eq.s32.totalorder %s137, 0
      %s140 = sadd.s32 %s139, 1
      %s141 = scalar_select %p138, %s139, %s140
      %p144 = pneg %p138
      %p145 = scmp.eq.s32.totalorder %s19, 1
      %p146 = por %p144, %p145
      %p147 = scmp.ne.s32.totalorder %s139, %s142
      %p148 = scmp.eq.s32.totalorder %s19, 0
      %p149 = por %p147, %p148
      %p150 = scmp.ne.s32.totalorder %s139, %s142
      %p151 = scmp.eq.s32.totalorder %s24, 1
      %p152 = por %p150, %p151
      %p153 = scmp.ne.s32.totalorder %s142, %s143
      %p154 = scmp.eq.s32.totalorder %s24, 0
      %p155 = por %p153, %p154
      %p156 = scmp.ne.s32.totalorder %s142, %s143
      %p157 = scmp.eq.s32.totalorder %s25, 1
      %p158 = por %p156, %p157
      %p160 = scmp.ne.s32.totalorder %s143, %s159
      %p161 = scmp.eq.s32.totalorder %s25, 0
      %p162 = por %p160, %p161
      %p163 = scmp.le.s32.totalorder 1, %s19
      %p164 = scmp.lt.s32.totalorder %s19, 3
      %p165 = pnand %p163, %p164
      %p166 = pneg %p165
      // Predicated region
      $region9: #{tpu_custom_call.1} parent=5 // pred_check
        _
      $region10: #{tpu_custom_call.1} parent=5 // pred_check_branch
        %168 = sbr.rel (%p165) target = $region12
      $region11: #{tpu_custom_call.1} parent=5 // pred_region
        %s169 = ssub.s32 %s19, 1
        // Predicated region
        $region13: #{tpu_custom_call.1} parent=11 // pred_check
          %p170 = pneg %p66
        $region14: #{tpu_custom_call.1} parent=11 // pred_check_branch
          %172 = sbr.rel (%p170) target = $region16
        $region15: #{tpu_custom_call.1} parent=11 // pred_region
          %174 = vsyncadd [#allocation6], 0
          %s175 = sshll.u32 %s1, 4
          %s176 = int_to_ptr.hbm [resolvable:$true] %s175
          %s177 = sshll.u32 [#allocation5], 4
          %s178 = int_to_ptr.vmem [resolvable:$true] %s177
          %183 = dma.hbm_to_vmem [thread:$0]  %s176, 2048, %s178, [#allocation6], 128, 128, 8
        $region16: #{tpu_custom_call.1} parent=11 // pred_fallthru
          _
        // Predicated region
        $region17: #{tpu_custom_call.1} parent=11 // pred_check
          %p184 = pneg %p87
        $region18: #{tpu_custom_call.1} parent=11 // pred_check_branch
          %186 = sbr.rel (%p184) target = $region20
        $region19: #{tpu_custom_call.1} parent=11 // pred_region
          %188 = vsyncadd [#allocation6], 0
          %s190 = sshll.u32 %s2, 4
          %s191 = int_to_ptr.hbm [resolvable:$true] %s190
          %s192 = sshll.u32 [#allocation7], 4
          %s193 = int_to_ptr.vmem [resolvable:$true] %s192
          %195 = dma.hbm_to_vmem [thread:$0]  %s191, 32, %s193, [#allocation6]
        $region20: #{tpu_custom_call.1} parent=11 // pred_fallthru
          _
        // Predicated region
        $region21: #{tpu_custom_call.1} parent=11 // pred_check
          %p196 = pneg %p108
        $region22: #{tpu_custom_call.1} parent=11 // pred_check_branch
          %198 = sbr.rel (%p196) target = $region24
        $region23: #{tpu_custom_call.1} parent=11 // pred_region
          %200 = vsyncadd [#allocation9], 0
          %s201 = sshll.u32 %s3, 4
          %s202 = int_to_ptr.hbm [resolvable:$true] %s201
          %s203 = sshll.u32 [#allocation8], 4
          %s204 = int_to_ptr.vmem [resolvable:$true] %s203
          %209 = dma.hbm_to_vmem [thread:$0]  %s202, 2048, %s204, [#allocation9], 64, 64, 4
        $region24: #{tpu_custom_call.1} parent=11 // pred_fallthru
          _
        // Predicated region
        $region25: #{tpu_custom_call.1} parent=11 // pred_check
          %p210 = pneg %p129
        $region26: #{tpu_custom_call.1} parent=11 // pred_check_branch
          %212 = sbr.rel (%p210) target = $region28
        $region27: #{tpu_custom_call.1} parent=11 // pred_region
          _
        $region28: #{tpu_custom_call.1} parent=11 // pred_fallthru
          _
      $region12: #{tpu_custom_call.1} parent=5 // pred_fallthru
        _
      %p213 = scmp.lt.s32.totalorder %s19, 2
      // Predicated region
      $region29: #{tpu_custom_call.1} parent=5 // pred_check
        %p214 = pneg %p213
      $region30: #{tpu_custom_call.1} parent=5 // pred_check_branch
        %216 = sbr.rel (%p214) target = $region32
      $region31: #{tpu_custom_call.1} parent=5 // pred_region
        // Predicated region
        $region33: #{tpu_custom_call.1} parent=31 // pred_check
          %p217 = pneg %p39
        $region34: #{tpu_custom_call.1} parent=31 // pred_check_branch
          %219 = sbr.rel (%p217) target = $region36
        $region35: #{tpu_custom_call.1} parent=31 // pred_region
          %s220 = sand.u32 %s29, 1
          %s221 = scalar_lea.sflag [#allocation3], %s220
          %s222 = sand.u32 %s29, 1
          %s223 = smul.addr %s222, 512
          %s224 = scalar_lea.vmem [#allocation2], %s223
          %s225 = smul.u32 64, %s19
          %227 = vsyncadd %s221, 0
          %s228 = smul.addr %s225, 8
          %s229 = scalar_lea.hbm %s0, %s228
          %s230 = sshll.u32 %s229, 4
          %s231 = int_to_ptr.hbm [resolvable:$true] %s230
          %s232 = sshll.u32 %s224, 4
          %s233 = int_to_ptr.vmem [resolvable:$true] %s232
          %238 = dma.hbm_to_vmem [thread:$0]  %s231, 8192, %s233, %s221, 128, 128, 8
        $region36: #{tpu_custom_call.1} parent=31 // pred_fallthru
          _
      $region32: #{tpu_custom_call.1} parent=5 // pred_fallthru
        _
      %p239 = scmp.le.s32.totalorder 1, %s19
      %p240 = scmp.lt.s32.totalorder %s19, 3
      %p241 = pnand %p239, %p240
      %p242 = pneg %p241
      // Predicated region
      $region37: #{tpu_custom_call.1} parent=5 // pred_check
        _
      $region38: #{tpu_custom_call.1} parent=5 // pred_check_branch
        %244 = sbr.rel (%p241) target = $region40
      $region39: #{tpu_custom_call.1} parent=5 // pred_region
        %s245 = ssub.s32 %s19, 1
        %s246 = sand.u32 %s32, 1
        %s247 = scalar_lea.sflag [#allocation3], %s246
        %s248 = sand.u32 %s32, 1
        %s249 = smul.addr %s248, 512
        %s250 = scalar_lea.vmem [#allocation2], %s249
        // Predicated region
        $region41: #{tpu_custom_call.1} parent=39 // pred_check
          %p251 = pneg %p45
        $region42: #{tpu_custom_call.1} parent=39 // pred_check_branch
          %253 = sbr.rel (%p251) target = $region44
        $region43: #{tpu_custom_call.1} parent=39 // pred_region
          %255 = dma.done %s247, 8192
        $region44: #{tpu_custom_call.1} parent=39 // pred_fallthru
          _
        // Predicated region
        $region45: #{tpu_custom_call.1} parent=39 // pred_check
          %p256 = pneg %p66
        $region46: #{tpu_custom_call.1} parent=39 // pred_check_branch
          %258 = sbr.rel (%p256) target = $region48
        $region47: #{tpu_custom_call.1} parent=39 // pred_region
          %260 = dma.done [#allocation6], 2048
        $region48: #{tpu_custom_call.1} parent=39 // pred_fallthru
          _
        // Predicated region
        $region49: #{tpu_custom_call.1} parent=39 // pred_check
          %p261 = pneg %p87
        $region50: #{tpu_custom_call.1} parent=39 // pred_check_branch
          %263 = sbr.rel (%p261) target = $region52
        $region51: #{tpu_custom_call.1} parent=39 // pred_region
          %265 = dma.done [#allocation6], 32
        $region52: #{tpu_custom_call.1} parent=39 // pred_fallthru
          _
        // Predicated region
        $region53: #{tpu_custom_call.1} parent=39 // pred_check
          %p266 = pneg %p108
        $region54: #{tpu_custom_call.1} parent=39 // pred_check_branch
          %268 = sbr.rel (%p266) target = $region56
        $region55: #{tpu_custom_call.1} parent=39 // pred_region
          %270 = dma.done [#allocation9], 2048
        $region56: #{tpu_custom_call.1} parent=39 // pred_fallthru
          _
        %s271 = sand.u32 %s32, 1
        %s272 = scalar_lea.sflag [#allocation3], %s271
        %s273 = sand.u32 %s32, 1
        %s274 = smul.addr %s273, 512
        %s275 = scalar_lea.vmem [#allocation2], %s274
        %p276 = pneg %p45
        %p277 = pneg %p42
        %p278 = pneg %p66
        %p279 = pneg %p63
        %p280 = pneg %p87
        %p281 = pneg %p84
        %p282 = pneg %p108
        %p283 = pneg %p105
        %p284 = pneg %p129
        %p285 = pneg %p126
        %p286 = pneg %p155
        %p287 = pneg %p152
        %s288 = sand.u32 %s142, 1
        %s289 = scalar_lea.sflag [#allocation4], %s288
        %s290 = sand.u32 %s142, 1
        %s291 = smul.addr %s290, 512
        %s292 = scalar_lea.vmem [#allocation10], %s291
        %s293 = smul.u32 64, %s24
        %s294 = smul.u32 64, %s24
        %v295 = vld [vmem:[%s250] sm:$0xff]
        %v296 = vld [vmem:[%s250 + $0x8] sm:$0xff]
        %v297 = vld [vmem:[%s250 + $0x10] sm:$0xff]
        %v298 = vld [vmem:[%s250 + $0x18] sm:$0xff]
        %v299 = vld [vmem:[%s250 + $0x20] sm:$0xff]
        %v300 = vld [vmem:[%s250 + $0x28] sm:$0xff]
        %v301 = vld [vmem:[%s250 + $0x30] sm:$0xff]
        %v302 = vld [vmem:[%s250 + $0x38] sm:$0xff]
        %v303 = vld [vmem:[%s250 + $0x40] sm:$0xff]
        %v304 = vld [vmem:[%s250 + $0x48] sm:$0xff]
        %v305 = vld [vmem:[%s250 + $0x50] sm:$0xff]
        %v306 = vld [vmem:[%s250 + $0x58] sm:$0xff]
        %v307 = vld [vmem:[%s250 + $0x60] sm:$0xff]
        %v308 = vld [vmem:[%s250 + $0x68] sm:$0xff]
        %v309 = vld [vmem:[%s250 + $0x70] sm:$0xff]
        %v310 = vld [vmem:[%s250 + $0x78] sm:$0xff]
        %v311 = vld [vmem:[%s250 + $0x80] sm:$0xff]
        %v312 = vld [vmem:[%s250 + $0x88] sm:$0xff]
        %v313 = vld [vmem:[%s250 + $0x90] sm:$0xff]
        %v314 = vld [vmem:[%s250 + $0x98] sm:$0xff]
        %v315 = vld [vmem:[%s250 + $0xa0] sm:$0xff]
        %v316 = vld [vmem:[%s250 + $0xa8] sm:$0xff]
        %v317 = vld [vmem:[%s250 + $0xb0] sm:$0xff]
        %v318 = vld [vmem:[%s250 + $0xb8] sm:$0xff]
        %v319 = vld [vmem:[%s250 + $0xc0] sm:$0xff]
        %v320 = vld [vmem:[%s250 + $0xc8] sm:$0xff]
        %v321 = vld [vmem:[%s250 + $0xd0] sm:$0xff]
        %v322 = vld [vmem:[%s250 + $0xd8] sm:$0xff]
        %v323 = vld [vmem:[%s250 + $0xe0] sm:$0xff]
        %v324 = vld [vmem:[%s250 + $0xe8] sm:$0xff]
        %v325 = vld [vmem:[%s250 + $0xf0] sm:$0xff]
        %v326 = vld [vmem:[%s250 + $0xf8] sm:$0xff]
        %v327 = vld [vmem:[%s250 + $0x100] sm:$0xff]
        %v328 = vld [vmem:[%s250 + $0x108] sm:$0xff]
        %v329 = vld [vmem:[%s250 + $0x110] sm:$0xff]
        %v330 = vld [vmem:[%s250 + $0x118] sm:$0xff]
        %v331 = vld [vmem:[%s250 + $0x120] sm:$0xff]
        %v332 = vld [vmem:[%s250 + $0x128] sm:$0xff]
        %v333 = vld [vmem:[%s250 + $0x130] sm:$0xff]
        %v334 = vld [vmem:[%s250 + $0x138] sm:$0xff]
        %v335 = vld [vmem:[%s250 + $0x140] sm:$0xff]
        %v336 = vld [vmem:[%s250 + $0x148] sm:$0xff]
        %v337 = vld [vmem:[%s250 + $0x150] sm:$0xff]
        %v338 = vld [vmem:[%s250 + $0x158] sm:$0xff]
        %v339 = vld [vmem:[%s250 + $0x160] sm:$0xff]
        %v340 = vld [vmem:[%s250 + $0x168] sm:$0xff]
        %v341 = vld [vmem:[%s250 + $0x170] sm:$0xff]
        %v342 = vld [vmem:[%s250 + $0x178] sm:$0xff]
        %v343 = vld [vmem:[%s250 + $0x180] sm:$0xff]
        %v344 = vld [vmem:[%s250 + $0x188] sm:$0xff]
        %v345 = vld [vmem:[%s250 + $0x190] sm:$0xff]
        %v346 = vld [vmem:[%s250 + $0x198] sm:$0xff]
        %v347 = vld [vmem:[%s250 + $0x1a0] sm:$0xff]
        %v348 = vld [vmem:[%s250 + $0x1a8] sm:$0xff]
        %v349 = vld [vmem:[%s250 + $0x1b0] sm:$0xff]
        %v350 = vld [vmem:[%s250 + $0x1b8] sm:$0xff]
        %v351 = vld [vmem:[%s250 + $0x1c0] sm:$0xff]
        %v352 = vld [vmem:[%s250 + $0x1c8] sm:$0xff]
        %v353 = vld [vmem:[%s250 + $0x1d0] sm:$0xff]
        %v354 = vld [vmem:[%s250 + $0x1d8] sm:$0xff]
        %v355 = vld [vmem:[%s250 + $0x1e0] sm:$0xff]
        %v356 = vld [vmem:[%s250 + $0x1e8] sm:$0xff]
        %v357 = vld [vmem:[%s250 + $0x1f0] sm:$0xff]
        %v358 = vld [vmem:[%s250 + $0x1f8] sm:$0xff]
        %v359 = vpack.c.bf16 %v296, %v295
        %v360 = vpack.c.bf16 %v298, %v297
        %v361 = vpack.c.bf16 %v300, %v299
        %v362 = vpack.c.bf16 %v302, %v301
        %v363 = vpack.c.bf16 %v304, %v303
        %v364 = vpack.c.bf16 %v306, %v305
        %v365 = vpack.c.bf16 %v308, %v307
        %v366 = vpack.c.bf16 %v310, %v309
        %v367 = vpack.c.bf16 %v312, %v311
        %v368 = vpack.c.bf16 %v314, %v313
        %v369 = vpack.c.bf16 %v316, %v315
        %v370 = vpack.c.bf16 %v318, %v317
        %v371 = vpack.c.bf16 %v320, %v319
        %v372 = vpack.c.bf16 %v322, %v321
        %v373 = vpack.c.bf16 %v324, %v323
        %v374 = vpack.c.bf16 %v326, %v325
        %v375 = vpack.c.bf16 %v328, %v327
        %v376 = vpack.c.bf16 %v330, %v329
        %v377 = vpack.c.bf16 %v332, %v331
        %v378 = vpack.c.bf16 %v334, %v333
        %v379 = vpack.c.bf16 %v336, %v335
        %v380 = vpack.c.bf16 %v338, %v337
        %v381 = vpack.c.bf16 %v340, %v339
        %v382 = vpack.c.bf16 %v342, %v341
        %v383 = vpack.c.bf16 %v344, %v343
        %v384 = vpack.c.bf16 %v346, %v345
        %v385 = vpack.c.bf16 %v348, %v347
        %v386 = vpack.c.bf16 %v350, %v349
        %v387 = vpack.c.bf16 %v352, %v351
        %v388 = vpack.c.bf16 %v354, %v353
        %v389 = vpack.c.bf16 %v356, %v355
        %v390 = vpack.c.bf16 %v358, %v357
        %v391 = vld [vmem:[#allocation5] sm:$0xff]
        %v392 = vld [vmem:[#allocation5 + $0x8] sm:$0xff]
        %v393 = vld [vmem:[#allocation5 + $0x10] sm:$0xff]
        %v394 = vld [vmem:[#allocation5 + $0x18] sm:$0xff]
        %v395 = vld [vmem:[#allocation5 + $0x20] sm:$0xff]
        %v396 = vld [vmem:[#allocation5 + $0x28] sm:$0xff]
        %v397 = vld [vmem:[#allocation5 + $0x30] sm:$0xff]
        %v398 = vld [vmem:[#allocation5 + $0x38] sm:$0xff]
        %v399 = vld [vmem:[#allocation5 + $0x40] sm:$0xff]
        %v400 = vld [vmem:[#allocation5 + $0x48] sm:$0xff]
        %v401 = vld [vmem:[#allocation5 + $0x50] sm:$0xff]
        %v402 = vld [vmem:[#allocation5 + $0x58] sm:$0xff]
        %v403 = vld [vmem:[#allocation5 + $0x60] sm:$0xff]
        %v404 = vld [vmem:[#allocation5 + $0x68] sm:$0xff]
        %v405 = vld [vmem:[#allocation5 + $0x70] sm:$0xff]
        %v406 = vld [vmem:[#allocation5 + $0x78] sm:$0xff]
        %v407 = vld [vmem:[#allocation7] sm:$0x3]
        %v409 = vperm.slane %v407, 0
        %v410 = vperm.slane %v407, 1
        %v429 = vunpack.c.l.b16 %v391
        %v430 = vunpack.c.h.b16 %v391
        %v431 = vunpack.c.l.b16 %v392
        %v432 = vunpack.c.h.b16 %v392
        %v433 = vunpack.c.l.b16 %v393
        %v434 = vunpack.c.h.b16 %v393
        %v435 = vunpack.c.l.b16 %v394
        %v436 = vunpack.c.h.b16 %v394
        %v437 = vunpack.c.l.b16 %v395
        %v438 = vunpack.c.h.b16 %v395
        %v439 = vunpack.c.l.b16 %v396
        %v440 = vunpack.c.h.b16 %v396
        %v441 = vunpack.c.l.b16 %v397
        %v442 = vunpack.c.h.b16 %v397
        %v443 = vunpack.c.l.b16 %v398
        %v444 = vunpack.c.h.b16 %v398
        %v445 = vunpack.c.l.b16 %v399
        %v446 = vunpack.c.h.b16 %v399
        %v447 = vunpack.c.l.b16 %v400
        %v448 = vunpack.c.h.b16 %v400
        %v449 = vunpack.c.l.b16 %v401
        %v450 = vunpack.c.h.b16 %v401
        %v451 = vunpack.c.l.b16 %v402
        %v452 = vunpack.c.h.b16 %v402
        %v453 = vunpack.c.l.b16 %v403
        %v454 = vunpack.c.h.b16 %v403
        %v455 = vunpack.c.l.b16 %v404
        %v456 = vunpack.c.h.b16 %v404
        %v457 = vunpack.c.l.b16 %v405
        %v458 = vunpack.c.h.b16 %v405
        %v459 = vunpack.c.l.b16 %v406
        %v460 = vunpack.c.h.b16 %v406
        %v461 = vpack.c.b16 %v431, %v429
        %v462 = vpack.c.b16 %v432, %v430
        %v463 = vpack.c.b16 %v435, %v433
        %v464 = vpack.c.b16 %v436, %v434
        %v465 = vpack.c.b16 %v439, %v437
        %v466 = vpack.c.b16 %v440, %v438
        %v467 = vpack.c.b16 %v443, %v441
        %v468 = vpack.c.b16 %v444, %v442
        %v469 = vpack.c.b16 %v447, %v445
        %v470 = vpack.c.b16 %v448, %v446
        %v471 = vpack.c.b16 %v451, %v449
        %v472 = vpack.c.b16 %v452, %v450
        %v473 = vpack.c.b16 %v455, %v453
        %v474 = vpack.c.b16 %v456, %v454
        %v475 = vpack.c.b16 %v459, %v457
        %v476 = vpack.c.b16 %v460, %v458
        %493 = vmatpush.bf16.msra.mxu0 %v475
        %494 = vmatpush.bf16.msra.mxu0 %v473
        %495 = vmatpush.bf16.msra.mxu0 %v471
        %496 = vmatpush.bf16.msra.mxu0 %v469
        %497 = vmatpush.bf16.msra.mxu0 %v467
        %498 = vmatpush.bf16.msra.mxu0 %v465
        %499 = vmatpush.bf16.msra.mxu0 %v463
        %500 = vmatpush.bf16.msra.mxu0 %v461
        %501 = vmatmul.bf16.gmra.mxu0 %v359
        %v502 = vpop.f32.mrf.mxu0
        %v503 = vadd.f32 %v409, %v502
        %v504 = vpop.f32.mrf.mxu0
        %v505 = vadd.f32 %v409, %v504
        %506 = vmatmul.bf16.gmra.mxu0 %v360
        %v507 = vpop.f32.mrf.mxu0
        %v508 = vadd.f32 %v409, %v507
        %v509 = vpop.f32.mrf.mxu0
        %v510 = vadd.f32 %v409, %v509
        %511 = vmatmul.bf16.gmra.mxu0 %v361
        %v512 = vpop.f32.mrf.mxu0
        %v513 = vadd.f32 %v409, %v512
        %v514 = vpop.f32.mrf.mxu0
        %v515 = vadd.f32 %v409, %v514
        %516 = vmatmul.bf16.gmra.mxu0 %v362
        %v517 = vpop.f32.mrf.mxu0
        %v518 = vadd.f32 %v409, %v517
        %v519 = vpop.f32.mrf.mxu0
        %v520 = vadd.f32 %v409, %v519
        %521 = vmatmul.bf16.gmra.mxu0 %v363
        %v522 = vpop.f32.mrf.mxu0
        %v523 = vadd.f32 %v409, %v522
        %v524 = vpop.f32.mrf.mxu0
        %v525 = vadd.f32 %v409, %v524
        %526 = vmatmul.bf16.gmra.mxu0 %v364
        %v527 = vpop.f32.mrf.mxu0
        %v528 = vadd.f32 %v409, %v527
        %v529 = vpop.f32.mrf.mxu0
        %v530 = vadd.f32 %v409, %v529
        %531 = vmatmul.bf16.gmra.mxu0 %v365
        %v532 = vpop.f32.mrf.mxu0
        %v533 = vadd.f32 %v409, %v532
        %v534 = vpop.f32.mrf.mxu0
        %v535 = vadd.f32 %v409, %v534
        %536 = vmatmul.bf16.gmra.mxu0 %v366
        %v537 = vpop.f32.mrf.mxu0
        %v538 = vadd.f32 %v409, %v537
        %v539 = vpop.f32.mrf.mxu0
        %v540 = vadd.f32 %v409, %v539
        %541 = vmatmul.bf16.gmra.mxu0 %v367
        %v542 = vpop.f32.mrf.mxu0
        %v543 = vadd.f32 %v409, %v542
        %v544 = vpop.f32.mrf.mxu0
        %v545 = vadd.f32 %v409, %v544
        %546 = vmatmul.bf16.gmra.mxu0 %v368
        %v547 = vpop.f32.mrf.mxu0
        %v548 = vadd.f32 %v409, %v547
        %v549 = vpop.f32.mrf.mxu0
        %v550 = vadd.f32 %v409, %v549
        %551 = vmatmul.bf16.gmra.mxu0 %v369
        %v552 = vpop.f32.mrf.mxu0
        %v553 = vadd.f32 %v409, %v552
        %v554 = vpop.f32.mrf.mxu0
        %v555 = vadd.f32 %v409, %v554
        %556 = vmatmul.bf16.gmra.mxu0 %v370
        %v557 = vpop.f32.mrf.mxu0
        %v558 = vadd.f32 %v409, %v557
        %v559 = vpop.f32.mrf.mxu0
        %v560 = vadd.f32 %v409, %v559
        %561 = vmatmul.bf16.gmra.mxu0 %v371
        %v562 = vpop.f32.mrf.mxu0
        %v563 = vadd.f32 %v409, %v562
        %v564 = vpop.f32.mrf.mxu0
        %v565 = vadd.f32 %v409, %v564
        %566 = vmatmul.bf16.gmra.mxu0 %v372
        %v567 = vpop.f32.mrf.mxu0
        %v568 = vadd.f32 %v409, %v567
        %v569 = vpop.f32.mrf.mxu0
        %v570 = vadd.f32 %v409, %v569
        %571 = vmatmul.bf16.gmra.mxu0 %v373
        %v572 = vpop.f32.mrf.mxu0
        %v573 = vadd.f32 %v409, %v572
        %v574 = vpop.f32.mrf.mxu0
        %v575 = vadd.f32 %v409, %v574
        %576 = vmatmul.bf16.gmra.mxu0 %v374
        %v577 = vpop.f32.mrf.mxu0
        %v578 = vadd.f32 %v409, %v577
        %v579 = vpop.f32.mrf.mxu0
        %v580 = vadd.f32 %v409, %v579
        %581 = vmatmul.bf16.gmra.mxu0 %v375
        %v582 = vpop.f32.mrf.mxu0
        %v583 = vadd.f32 %v409, %v582
        %v584 = vpop.f32.mrf.mxu0
        %v585 = vadd.f32 %v409, %v584
        %586 = vmatmul.bf16.gmra.mxu0 %v376
        %v587 = vpop.f32.mrf.mxu0
        %v588 = vadd.f32 %v409, %v587
        %v589 = vpop.f32.mrf.mxu0
        %v590 = vadd.f32 %v409, %v589
        %591 = vmatmul.bf16.gmra.mxu0 %v377
        %v592 = vpop.f32.mrf.mxu0
        %v593 = vadd.f32 %v409, %v592
        %v594 = vpop.f32.mrf.mxu0
        %v595 = vadd.f32 %v409, %v594
        %596 = vmatmul.bf16.gmra.mxu0 %v378
        %v597 = vpop.f32.mrf.mxu0
        %v598 = vadd.f32 %v409, %v597
        %v599 = vpop.f32.mrf.mxu0
        %v600 = vadd.f32 %v409, %v599
        %601 = vmatmul.bf16.gmra.mxu0 %v379
        %v602 = vpop.f32.mrf.mxu0
        %v603 = vadd.f32 %v409, %v602
        %v604 = vpop.f32.mrf.mxu0
        %v605 = vadd.f32 %v409, %v604
        %606 = vmatmul.bf16.gmra.mxu0 %v380
        %v607 = vpop.f32.mrf.mxu0
        %v608 = vadd.f32 %v409, %v607
        %v609 = vpop.f32.mrf.mxu0
        %v610 = vadd.f32 %v409, %v609
        %611 = vmatmul.bf16.gmra.mxu0 %v381
        %v612 = vpop.f32.mrf.mxu0
        %v613 = vadd.f32 %v409, %v612
        %v614 = vpop.f32.mrf.mxu0
        %v615 = vadd.f32 %v409, %v614
        %616 = vmatmul.bf16.gmra.mxu0 %v382
        %v617 = vpop.f32.mrf.mxu0
        %v618 = vadd.f32 %v409, %v617
        %v619 = vpop.f32.mrf.mxu0
        %v620 = vadd.f32 %v409, %v619
        %621 = vmatmul.bf16.gmra.mxu0 %v383
        %v622 = vpop.f32.mrf.mxu0
        %v623 = vadd.f32 %v409, %v622
        %v624 = vpop.f32.mrf.mxu0
        %v625 = vadd.f32 %v409, %v624
        %626 = vmatmul.bf16.gmra.mxu0 %v384
        %v627 = vpop.f32.mrf.mxu0
        %v628 = vadd.f32 %v409, %v627
        %v629 = vpop.f32.mrf.mxu0
        %v630 = vadd.f32 %v409, %v629
        %631 = vmatmul.bf16.gmra.mxu0 %v385
        %v632 = vpop.f32.mrf.mxu0
        %v633 = vadd.f32 %v409, %v632
        %v634 = vpop.f32.mrf.mxu0
        %v635 = vadd.f32 %v409, %v634
        %636 = vmatmul.bf16.gmra.mxu0 %v386
        %v637 = vpop.f32.mrf.mxu0
        %v638 = vadd.f32 %v409, %v637
        %v639 = vpop.f32.mrf.mxu0
        %v640 = vadd.f32 %v409, %v639
        %641 = vmatmul.bf16.gmra.mxu0 %v387
        %v642 = vpop.f32.mrf.mxu0
        %v643 = vadd.f32 %v409, %v642
        %v644 = vpop.f32.mrf.mxu0
        %v645 = vadd.f32 %v409, %v644
        %646 = vmatmul.bf16.gmra.mxu0 %v388
        %v647 = vpop.f32.mrf.mxu0
        %v648 = vadd.f32 %v409, %v647
        %v649 = vpop.f32.mrf.mxu0
        %v650 = vadd.f32 %v409, %v649
        %651 = vmatmul.bf16.gmra.mxu0 %v389
        %v652 = vpop.f32.mrf.mxu0
        %v653 = vadd.f32 %v409, %v652
        %v654 = vpop.f32.mrf.mxu0
        %v655 = vadd.f32 %v409, %v654
        %656 = vmatmul.bf16.gmra.mxu0 %v390
        %v657 = vpop.f32.mrf.mxu0
        %v658 = vadd.f32 %v409, %v657
        %v659 = vpop.f32.mrf.mxu0
        %v660 = vadd.f32 %v409, %v659
        %661 = vdwg.mxu0
        %662 = vmatpush.bf16.msra.mxu0 %v476
        %663 = vmatpush.bf16.msra.mxu0 %v474
        %664 = vmatpush.bf16.msra.mxu0 %v472
        %665 = vmatpush.bf16.msra.mxu0 %v470
        %666 = vmatpush.bf16.msra.mxu0 %v468
        %667 = vmatpush.bf16.msra.mxu0 %v466
        %668 = vmatpush.bf16.msra.mxu0 %v464
        %669 = vmatpush.bf16.msra.mxu0 %v462
        %670 = vmatmul.bf16.gmra.mxu0 %v359
        %v671 = vpop.f32.mrf.mxu0
        %v672 = vadd.f32 %v410, %v671
        %v673 = vpop.f32.mrf.mxu0
        %v674 = vadd.f32 %v410, %v673
        %675 = vmatmul.bf16.gmra.mxu0 %v360
        %v676 = vpop.f32.mrf.mxu0
        %v677 = vadd.f32 %v410, %v676
        %v678 = vpop.f32.mrf.mxu0
        %v679 = vadd.f32 %v410, %v678
        %680 = vmatmul.bf16.gmra.mxu0 %v361
        %v681 = vpop.f32.mrf.mxu0
        %v682 = vadd.f32 %v410, %v681
        %v683 = vpop.f32.mrf.mxu0
        %v684 = vadd.f32 %v410, %v683
        %685 = vmatmul.bf16.gmra.mxu0 %v362
        %v686 = vpop.f32.mrf.mxu0
        %v687 = vadd.f32 %v410, %v686
        %v688 = vpop.f32.mrf.mxu0
        %v689 = vadd.f32 %v410, %v688
        %690 = vmatmul.bf16.gmra.mxu0 %v363
        %v691 = vpop.f32.mrf.mxu0
        %v692 = vadd.f32 %v410, %v691
        %v693 = vpop.f32.mrf.mxu0
        %v694 = vadd.f32 %v410, %v693
        %695 = vmatmul.bf16.gmra.mxu0 %v364
        %v696 = vpop.f32.mrf.mxu0
        %v697 = vadd.f32 %v410, %v696
        %v698 = vpop.f32.mrf.mxu0
        %v699 = vadd.f32 %v410, %v698
        %700 = vmatmul.bf16.gmra.mxu0 %v365
        %v701 = vpop.f32.mrf.mxu0
        %v702 = vadd.f32 %v410, %v701
        %v703 = vpop.f32.mrf.mxu0
        %v704 = vadd.f32 %v410, %v703
        %705 = vmatmul.bf16.gmra.mxu0 %v366
        %v706 = vpop.f32.mrf.mxu0
        %v707 = vadd.f32 %v410, %v706
        %v708 = vpop.f32.mrf.mxu0
        %v709 = vadd.f32 %v410, %v708
        %710 = vmatmul.bf16.gmra.mxu0 %v367
        %v711 = vpop.f32.mrf.mxu0
        %v712 = vadd.f32 %v410, %v711
        %v713 = vpop.f32.mrf.mxu0
        %v714 = vadd.f32 %v410, %v713
        %715 = vmatmul.bf16.gmra.mxu0 %v368
        %v716 = vpop.f32.mrf.mxu0
        %v717 = vadd.f32 %v410, %v716
        %v718 = vpop.f32.mrf.mxu0
        %v719 = vadd.f32 %v410, %v718
        %720 = vmatmul.bf16.gmra.mxu0 %v369
        %v721 = vpop.f32.mrf.mxu0
        %v722 = vadd.f32 %v410, %v721
        %v723 = vpop.f32.mrf.mxu0
        %v724 = vadd.f32 %v410, %v723
        %725 = vmatmul.bf16.gmra.mxu0 %v370
        %v726 = vpop.f32.mrf.mxu0
        %v727 = vadd.f32 %v410, %v726
        %v728 = vpop.f32.mrf.mxu0
        %v729 = vadd.f32 %v410, %v728
        %730 = vmatmul.bf16.gmra.mxu0 %v371
        %v731 = vpop.f32.mrf.mxu0
        %v732 = vadd.f32 %v410, %v731
        %v733 = vpop.f32.mrf.mxu0
        %v734 = vadd.f32 %v410, %v733
        %735 = vmatmul.bf16.gmra.mxu0 %v372
        %v736 = vpop.f32.mrf.mxu0
        %v737 = vadd.f32 %v410, %v736
        %v738 = vpop.f32.mrf.mxu0
        %v739 = vadd.f32 %v410, %v738
        %740 = vmatmul.bf16.gmra.mxu0 %v373
        %v741 = vpop.f32.mrf.mxu0
        %v742 = vadd.f32 %v410, %v741
        %v743 = vpop.f32.mrf.mxu0
        %v744 = vadd.f32 %v410, %v743
        %745 = vmatmul.bf16.gmra.mxu0 %v374
        %v746 = vpop.f32.mrf.mxu0
        %v747 = vadd.f32 %v410, %v746
        %v748 = vpop.f32.mrf.mxu0
        %v749 = vadd.f32 %v410, %v748
        %750 = vmatmul.bf16.gmra.mxu0 %v375
        %v751 = vpop.f32.mrf.mxu0
        %v752 = vadd.f32 %v410, %v751
        %v753 = vpop.f32.mrf.mxu0
        %v754 = vadd.f32 %v410, %v753
        %755 = vmatmul.bf16.gmra.mxu0 %v376
        %v756 = vpop.f32.mrf.mxu0
        %v757 = vadd.f32 %v410, %v756
        %v758 = vpop.f32.mrf.mxu0
        %v759 = vadd.f32 %v410, %v758
        %760 = vmatmul.bf16.gmra.mxu0 %v377
        %v761 = vpop.f32.mrf.mxu0
        %v762 = vadd.f32 %v410, %v761
        %v763 = vpop.f32.mrf.mxu0
        %v764 = vadd.f32 %v410, %v763
        %765 = vmatmul.bf16.gmra.mxu0 %v378
        %v766 = vpop.f32.mrf.mxu0
        %v767 = vadd.f32 %v410, %v766
        %v768 = vpop.f32.mrf.mxu0
        %v769 = vadd.f32 %v410, %v768
        %770 = vmatmul.bf16.gmra.mxu0 %v379
        %v771 = vpop.f32.mrf.mxu0
        %v772 = vadd.f32 %v410, %v771
        %v773 = vpop.f32.mrf.mxu0
        %v774 = vadd.f32 %v410, %v773
        %775 = vmatmul.bf16.gmra.mxu0 %v380
        %v776 = vpop.f32.mrf.mxu0
        %v777 = vadd.f32 %v410, %v776
        %v778 = vpop.f32.mrf.mxu0
        %v779 = vadd.f32 %v410, %v778
        %780 = vmatmul.bf16.gmra.mxu0 %v381
        %v781 = vpop.f32.mrf.mxu0
        %v782 = vadd.f32 %v410, %v781
        %v783 = vpop.f32.mrf.mxu0
        %v784 = vadd.f32 %v410, %v783
        %785 = vmatmul.bf16.gmra.mxu0 %v382
        %v786 = vpop.f32.mrf.mxu0
        %v787 = vadd.f32 %v410, %v786
        %v788 = vpop.f32.mrf.mxu0
        %v789 = vadd.f32 %v410, %v788
        %790 = vmatmul.bf16.gmra.mxu0 %v383
        %v791 = vpop.f32.mrf.mxu0
        %v792 = vadd.f32 %v410, %v791
        %v793 = vpop.f32.mrf.mxu0
        %v794 = vadd.f32 %v410, %v793
        %795 = vmatmul.bf16.gmra.mxu0 %v384
        %v796 = vpop.f32.mrf.mxu0
        %v797 = vadd.f32 %v410, %v796
        %v798 = vpop.f32.mrf.mxu0
        %v799 = vadd.f32 %v410, %v798
        %800 = vmatmul.bf16.gmra.mxu0 %v385
        %v801 = vpop.f32.mrf.mxu0
        %v802 = vadd.f32 %v410, %v801
        %v803 = vpop.f32.mrf.mxu0
        %v804 = vadd.f32 %v410, %v803
        %805 = vmatmul.bf16.gmra.mxu0 %v386
        %v806 = vpop.f32.mrf.mxu0
        %v807 = vadd.f32 %v410, %v806
        %v808 = vpop.f32.mrf.mxu0
        %v809 = vadd.f32 %v410, %v808
        %810 = vmatmul.bf16.gmra.mxu0 %v387
        %v811 = vpop.f32.mrf.mxu0
        %v812 = vadd.f32 %v410, %v811
        %v813 = vpop.f32.mrf.mxu0
        %v814 = vadd.f32 %v410, %v813
        %815 = vmatmul.bf16.gmra.mxu0 %v388
        %v816 = vpop.f32.mrf.mxu0
        %v817 = vadd.f32 %v410, %v816
        %v818 = vpop.f32.mrf.mxu0
        %v819 = vadd.f32 %v410, %v818
        %820 = vmatmul.bf16.gmra.mxu0 %v389
        %v821 = vpop.f32.mrf.mxu0
        %v822 = vadd.f32 %v410, %v821
        %v823 = vpop.f32.mrf.mxu0
        %v824 = vadd.f32 %v410, %v823
        %825 = vmatmul.bf16.gmra.mxu0 %v390
        %v826 = vpop.f32.mrf.mxu0
        %v827 = vadd.f32 %v410, %v826
        %v828 = vpop.f32.mrf.mxu0
        %v829 = vadd.f32 %v410, %v828
        %830 = vdwg.mxu0
        %v831 = vmul.f32 %v503, %v503
        %v832 = vmul.f32 %v672, %v672
        %v833 = vmul.f32 %v505, %v505
        %v834 = vmul.f32 %v674, %v674
        %v835 = vmul.f32 %v508, %v508
        %v836 = vmul.f32 %v677, %v677
        %v837 = vmul.f32 %v510, %v510
        %v838 = vmul.f32 %v679, %v679
        %v839 = vmul.f32 %v513, %v513
        %v840 = vmul.f32 %v682, %v682
        %v841 = vmul.f32 %v515, %v515
        %v842 = vmul.f32 %v684, %v684
        %v843 = vmul.f32 %v518, %v518
        %v844 = vmul.f32 %v687, %v687
        %v845 = vmul.f32 %v520, %v520
        %v846 = vmul.f32 %v689, %v689
        %v847 = vmul.f32 %v523, %v523
        %v848 = vmul.f32 %v692, %v692
        %v849 = vmul.f32 %v525, %v525
        %v850 = vmul.f32 %v694, %v694
        %v851 = vmul.f32 %v528, %v528
        %v852 = vmul.f32 %v697, %v697
        %v853 = vmul.f32 %v530, %v530
        %v854 = vmul.f32 %v699, %v699
        %v855 = vmul.f32 %v533, %v533
        %v856 = vmul.f32 %v702, %v702
        %v857 = vmul.f32 %v535, %v535
        %v858 = vmul.f32 %v704, %v704
        %v859 = vmul.f32 %v538, %v538
        %v860 = vmul.f32 %v707, %v707
        %v861 = vmul.f32 %v540, %v540
        %v862 = vmul.f32 %v709, %v709
        %v863 = vmul.f32 %v543, %v543
        %v864 = vmul.f32 %v712, %v712
        %v865 = vmul.f32 %v545, %v545
        %v866 = vmul.f32 %v714, %v714
        %v867 = vmul.f32 %v548, %v548
        %v868 = vmul.f32 %v717, %v717
        %v869 = vmul.f32 %v550, %v550
        %v870 = vmul.f32 %v719, %v719
        %v871 = vmul.f32 %v553, %v553
        %v872 = vmul.f32 %v722, %v722
        %v873 = vmul.f32 %v555, %v555
        %v874 = vmul.f32 %v724, %v724
        %v875 = vmul.f32 %v558, %v558
        %v876 = vmul.f32 %v727, %v727
        %v877 = vmul.f32 %v560, %v560
        %v878 = vmul.f32 %v729, %v729
        %v879 = vmul.f32 %v563, %v563
        %v880 = vmul.f32 %v732, %v732
        %v881 = vmul.f32 %v565, %v565
        %v882 = vmul.f32 %v734, %v734
        %v883 = vmul.f32 %v568, %v568
        %v884 = vmul.f32 %v737, %v737
        %v885 = vmul.f32 %v570, %v570
        %v886 = vmul.f32 %v739, %v739
        %v887 = vmul.f32 %v573, %v573
        %v888 = vmul.f32 %v742, %v742
        %v889 = vmul.f32 %v575, %v575
        %v890 = vmul.f32 %v744, %v744
        %v891 = vmul.f32 %v578, %v578
        %v892 = vmul.f32 %v747, %v747
        %v893 = vmul.f32 %v580, %v580
        %v894 = vmul.f32 %v749, %v749
        %v895 = vmul.f32 %v583, %v583
        %v896 = vmul.f32 %v752, %v752
        %v897 = vmul.f32 %v585, %v585
        %v898 = vmul.f32 %v754, %v754
        %v899 = vmul.f32 %v588, %v588
        %v900 = vmul.f32 %v757, %v757
        %v901 = vmul.f32 %v590, %v590
        %v902 = vmul.f32 %v759, %v759
        %v903 = vmul.f32 %v593, %v593
        %v904 = vmul.f32 %v762, %v762
        %v905 = vmul.f32 %v595, %v595
        %v906 = vmul.f32 %v764, %v764
        %v907 = vmul.f32 %v598, %v598
        %v908 = vmul.f32 %v767, %v767
        %v909 = vmul.f32 %v600, %v600
        %v910 = vmul.f32 %v769, %v769
        %v911 = vmul.f32 %v603, %v603
        %v912 = vmul.f32 %v772, %v772
        %v913 = vmul.f32 %v605, %v605
        %v914 = vmul.f32 %v774, %v774
        %v915 = vmul.f32 %v608, %v608
        %v916 = vmul.f32 %v777, %v777
        %v917 = vmul.f32 %v610, %v610
        %v918 = vmul.f32 %v779, %v779
        %v919 = vmul.f32 %v613, %v613
        %v920 = vmul.f32 %v782, %v782
        %v921 = vmul.f32 %v615, %v615
        %v922 = vmul.f32 %v784, %v784
        %v923 = vmul.f32 %v618, %v618
        %v924 = vmul.f32 %v787, %v787
        %v925 = vmul.f32 %v620, %v620
        %v926 = vmul.f32 %v789, %v789
        %v927 = vmul.f32 %v623, %v623
        %v928 = vmul.f32 %v792, %v792
        %v929 = vmul.f32 %v625, %v625
        %v930 = vmul.f32 %v794, %v794
        %v931 = vmul.f32 %v628, %v628
        %v932 = vmul.f32 %v797, %v797
        %v933 = vmul.f32 %v630, %v630
        %v934 = vmul.f32 %v799, %v799
        %v935 = vmul.f32 %v633, %v633
        %v936 = vmul.f32 %v802, %v802
        %v937 = vmul.f32 %v635, %v635
        %v938 = vmul.f32 %v804, %v804
        %v939 = vmul.f32 %v638, %v638
        %v940 = vmul.f32 %v807, %v807
        %v941 = vmul.f32 %v640, %v640
        %v942 = vmul.f32 %v809, %v809
        %v943 = vmul.f32 %v643, %v643
        %v944 = vmul.f32 %v812, %v812
        %v945 = vmul.f32 %v645, %v645
        %v946 = vmul.f32 %v814, %v814
        %v947 = vmul.f32 %v648, %v648
        %v948 = vmul.f32 %v817, %v817
        %v949 = vmul.f32 %v650, %v650
        %v950 = vmul.f32 %v819, %v819
        %v951 = vmul.f32 %v653, %v653
        %v952 = vmul.f32 %v822, %v822
        %v953 = vmul.f32 %v655, %v655
        %v954 = vmul.f32 %v824, %v824
        %v955 = vmul.f32 %v658, %v658
        %v956 = vmul.f32 %v827, %v827
        %v957 = vmul.f32 %v660, %v660
        %v958 = vmul.f32 %v829, %v829
        %v959 = vmul.f32 %v503, %v831
        %v960 = vmul.f32 %v672, %v832
        %v961 = vmul.f32 %v505, %v833
        %v962 = vmul.f32 %v674, %v834
        %v963 = vmul.f32 %v508, %v835
        %v964 = vmul.f32 %v677, %v836
        %v965 = vmul.f32 %v510, %v837
        %v966 = vmul.f32 %v679, %v838
        %v967 = vmul.f32 %v513, %v839
        %v968 = vmul.f32 %v682, %v840
        %v969 = vmul.f32 %v515, %v841
        %v970 = vmul.f32 %v684, %v842
        %v971 = vmul.f32 %v518, %v843
        %v972 = vmul.f32 %v687, %v844
        %v973 = vmul.f32 %v520, %v845
        %v974 = vmul.f32 %v689, %v846
        %v975 = vmul.f32 %v523, %v847
        %v976 = vmul.f32 %v692, %v848
        %v977 = vmul.f32 %v525, %v849
        %v978 = vmul.f32 %v694, %v850
        %v979 = vmul.f32 %v528, %v851
        %v980 = vmul.f32 %v697, %v852
        %v981 = vmul.f32 %v530, %v853
        %v982 = vmul.f32 %v699, %v854
        %v983 = vmul.f32 %v533, %v855
        %v984 = vmul.f32 %v702, %v856
        %v985 = vmul.f32 %v535, %v857
        %v986 = vmul.f32 %v704, %v858
        %v987 = vmul.f32 %v538, %v859
        %v988 = vmul.f32 %v707, %v860
        %v989 = vmul.f32 %v540, %v861
        %v990 = vmul.f32 %v709, %v862
        %v991 = vmul.f32 %v543, %v863
        %v992 = vmul.f32 %v712, %v864
        %v993 = vmul.f32 %v545, %v865
        %v994 = vmul.f32 %v714, %v866
        %v995 = vmul.f32 %v548, %v867
        %v996 = vmul.f32 %v717, %v868
        %v997 = vmul.f32 %v550, %v869
        %v998 = vmul.f32 %v719, %v870
        %v999 = vmul.f32 %v553, %v871
        %v1000 = vmul.f32 %v722, %v872
        %v1001 = vmul.f32 %v555, %v873
        %v1002 = vmul.f32 %v724, %v874
        %v1003 = vmul.f32 %v558, %v875
        %v1004 = vmul.f32 %v727, %v876
        %v1005 = vmul.f32 %v560, %v877
        %v1006 = vmul.f32 %v729, %v878
        %v1007 = vmul.f32 %v563, %v879
        %v1008 = vmul.f32 %v732, %v880
        %v1009 = vmul.f32 %v565, %v881
        %v1010 = vmul.f32 %v734, %v882
        %v1011 = vmul.f32 %v568, %v883
        %v1012 = vmul.f32 %v737, %v884
        %v1013 = vmul.f32 %v570, %v885
        %v1014 = vmul.f32 %v739, %v886
        %v1015 = vmul.f32 %v573, %v887
        %v1016 = vmul.f32 %v742, %v888
        %v1017 = vmul.f32 %v575, %v889
        %v1018 = vmul.f32 %v744, %v890
        %v1019 = vmul.f32 %v578, %v891
        %v1020 = vmul.f32 %v747, %v892
        %v1021 = vmul.f32 %v580, %v893
        %v1022 = vmul.f32 %v749, %v894
        %v1023 = vmul.f32 %v583, %v895
        %v1024 = vmul.f32 %v752, %v896
        %v1025 = vmul.f32 %v585, %v897
        %v1026 = vmul.f32 %v754, %v898
        %v1027 = vmul.f32 %v588, %v899
        %v1028 = vmul.f32 %v757, %v900
        %v1029 = vmul.f32 %v590, %v901
        %v1030 = vmul.f32 %v759, %v902
        %v1031 = vmul.f32 %v593, %v903
        %v1032 = vmul.f32 %v762, %v904
        %v1033 = vmul.f32 %v595, %v905
        %v1034 = vmul.f32 %v764, %v906
        %v1035 = vmul.f32 %v598, %v907
        %v1036 = vmul.f32 %v767, %v908
        %v1037 = vmul.f32 %v600, %v909
        %v1038 = vmul.f32 %v769, %v910
        %v1039 = vmul.f32 %v603, %v911
        %v1040 = vmul.f32 %v772, %v912
        %v1041 = vmul.f32 %v605, %v913
        %v1042 = vmul.f32 %v774, %v914
        %v1043 = vmul.f32 %v608, %v915
        %v1044 = vmul.f32 %v777, %v916
        %v1045 = vmul.f32 %v610, %v917
        %v1046 = vmul.f32 %v779, %v918
        %v1047 = vmul.f32 %v613, %v919
        %v1048 = vmul.f32 %v782, %v920
        %v1049 = vmul.f32 %v615, %v921
        %v1050 = vmul.f32 %v784, %v922
        %v1051 = vmul.f32 %v618, %v923
        %v1052 = vmul.f32 %v787, %v924
        %v1053 = vmul.f32 %v620, %v925
        %v1054 = vmul.f32 %v789, %v926
        %v1055 = vmul.f32 %v623, %v927
        %v1056 = vmul.f32 %v792, %v928
        %v1057 = vmul.f32 %v625, %v929
        %v1058 = vmul.f32 %v794, %v930
        %v1059 = vmul.f32 %v628, %v931
        %v1060 = vmul.f32 %v797, %v932
        %v1061 = vmul.f32 %v630, %v933
        %v1062 = vmul.f32 %v799, %v934
        %v1063 = vmul.f32 %v633, %v935
        %v1064 = vmul.f32 %v802, %v936
        %v1065 = vmul.f32 %v635, %v937
        %v1066 = vmul.f32 %v804, %v938
        %v1067 = vmul.f32 %v638, %v939
        %v1068 = vmul.f32 %v807, %v940
        %v1069 = vmul.f32 %v640, %v941
        %v1070 = vmul.f32 %v809, %v942
        %v1071 = vmul.f32 %v643, %v943
        %v1072 = vmul.f32 %v812, %v944
        %v1073 = vmul.f32 %v645, %v945
        %v1074 = vmul.f32 %v814, %v946
        %v1075 = vmul.f32 %v648, %v947
        %v1076 = vmul.f32 %v817, %v948
        %v1077 = vmul.f32 %v650, %v949
        %v1078 = vmul.f32 %v819, %v950
        %v1079 = vmul.f32 %v653, %v951
        %v1080 = vmul.f32 %v822, %v952
        %v1081 = vmul.f32 %v655, %v953
        %v1082 = vmul.f32 %v824, %v954
        %v1083 = vmul.f32 %v658, %v955
        %v1084 = vmul.f32 %v827, %v956
        %v1085 = vmul.f32 %v660, %v957
        %v1086 = vmul.f32 %v829, %v958
        %v1087 = vmul.f32 %v959, 0.044715
        %v1088 = vmul.f32 %v960, 0.044715
        %v1089 = vmul.f32 %v961, 0.044715
        %v1090 = vmul.f32 %v962, 0.044715
        %v1091 = vmul.f32 %v963, 0.044715
        %v1092 = vmul.f32 %v964, 0.044715
        %v1093 = vmul.f32 %v965, 0.044715
        %v1094 = vmul.f32 %v966, 0.044715
        %v1095 = vmul.f32 %v967, 0.044715
        %v1096 = vmul.f32 %v968, 0.044715
        %v1097 = vmul.f32 %v969, 0.044715
        %v1098 = vmul.f32 %v970, 0.044715
        %v1099 = vmul.f32 %v971, 0.044715
        %v1100 = vmul.f32 %v972, 0.044715
        %v1101 = vmul.f32 %v973, 0.044715
        %v1102 = vmul.f32 %v974, 0.044715
        %v1103 = vmul.f32 %v975, 0.044715
        %v1104 = vmul.f32 %v976, 0.044715
        %v1105 = vmul.f32 %v977, 0.044715
        %v1106 = vmul.f32 %v978, 0.044715
        %v1107 = vmul.f32 %v979, 0.044715
        %v1108 = vmul.f32 %v980, 0.044715
        %v1109 = vmul.f32 %v981, 0.044715
        %v1110 = vmul.f32 %v982, 0.044715
        %v1111 = vmul.f32 %v983, 0.044715
        %v1112 = vmul.f32 %v984, 0.044715
        %v1113 = vmul.f32 %v985, 0.044715
        %v1114 = vmul.f32 %v986, 0.044715
        %v1115 = vmul.f32 %v987, 0.044715
        %v1116 = vmul.f32 %v988, 0.044715
        %v1117 = vmul.f32 %v989, 0.044715
        %v1118 = vmul.f32 %v990, 0.044715
        %v1119 = vmul.f32 %v991, 0.044715
        %v1120 = vmul.f32 %v992, 0.044715
        %v1121 = vmul.f32 %v993, 0.044715
        %v1122 = vmul.f32 %v994, 0.044715
        %v1123 = vmul.f32 %v995, 0.044715
        %v1124 = vmul.f32 %v996, 0.044715
        %v1125 = vmul.f32 %v997, 0.044715
        %v1126 = vmul.f32 %v998, 0.044715
        %v1127 = vmul.f32 %v999, 0.044715
        %v1128 = vmul.f32 %v1000, 0.044715
        %v1129 = vmul.f32 %v1001, 0.044715
        %v1130 = vmul.f32 %v1002, 0.044715
        %v1131 = vmul.f32 %v1003, 0.044715
        %v1132 = vmul.f32 %v1004, 0.044715
        %v1133 = vmul.f32 %v1005, 0.044715
        %v1134 = vmul.f32 %v1006, 0.044715
        %v1135 = vmul.f32 %v1007, 0.044715
        %v1136 = vmul.f32 %v1008, 0.044715
        %v1137 = vmul.f32 %v1009, 0.044715
        %v1138 = vmul.f32 %v1010, 0.044715
        %v1139 = vmul.f32 %v1011, 0.044715
        %v1140 = vmul.f32 %v1012, 0.044715
        %v1141 = vmul.f32 %v1013, 0.044715
        %v1142 = vmul.f32 %v1014, 0.044715
        %v1143 = vmul.f32 %v1015, 0.044715
        %v1144 = vmul.f32 %v1016, 0.044715
        %v1145 = vmul.f32 %v1017, 0.044715
        %v1146 = vmul.f32 %v1018, 0.044715
        %v1147 = vmul.f32 %v1019, 0.044715
        %v1148 = vmul.f32 %v1020, 0.044715
        %v1149 = vmul.f32 %v1021, 0.044715
        %v1150 = vmul.f32 %v1022, 0.044715
        %v1151 = vmul.f32 %v1023, 0.044715
        %v1152 = vmul.f32 %v1024, 0.044715
        %v1153 = vmul.f32 %v1025, 0.044715
        %v1154 = vmul.f32 %v1026, 0.044715
        %v1155 = vmul.f32 %v1027, 0.044715
        %v1156 = vmul.f32 %v1028, 0.044715
        %v1157 = vmul.f32 %v1029, 0.044715
        %v1158 = vmul.f32 %v1030, 0.044715
        %v1159 = vmul.f32 %v1031, 0.044715
        %v1160 = vmul.f32 %v1032, 0.044715
        %v1161 = vmul.f32 %v1033, 0.044715
        %v1162 = vmul.f32 %v1034, 0.044715
        %v1163 = vmul.f32 %v1035, 0.044715
        %v1164 = vmul.f32 %v1036, 0.044715
        %v1165 = vmul.f32 %v1037, 0.044715
        %v1166 = vmul.f32 %v1038, 0.044715
        %v1167 = vmul.f32 %v1039, 0.044715
        %v1168 = vmul.f32 %v1040, 0.044715
        %v1169 = vmul.f32 %v1041, 0.044715
        %v1170 = vmul.f32 %v1042, 0.044715
        %v1171 = vmul.f32 %v1043, 0.044715
        %v1172 = vmul.f32 %v1044, 0.044715
        %v1173 = vmul.f32 %v1045, 0.044715
        %v1174 = vmul.f32 %v1046, 0.044715
        %v1175 = vmul.f32 %v1047, 0.044715
        %v1176 = vmul.f32 %v1048, 0.044715
        %v1177 = vmul.f32 %v1049, 0.044715
        %v1178 = vmul.f32 %v1050, 0.044715
        %v1179 = vmul.f32 %v1051, 0.044715
        %v1180 = vmul.f32 %v1052, 0.044715
        %v1181 = vmul.f32 %v1053, 0.044715
        %v1182 = vmul.f32 %v1054, 0.044715
        %v1183 = vmul.f32 %v1055, 0.044715
        %v1184 = vmul.f32 %v1056, 0.044715
        %v1185 = vmul.f32 %v1057, 0.044715
        %v1186 = vmul.f32 %v1058, 0.044715
        %v1187 = vmul.f32 %v1059, 0.044715
        %v1188 = vmul.f32 %v1060, 0.044715
        %v1189 = vmul.f32 %v1061, 0.044715
        %v1190 = vmul.f32 %v1062, 0.044715
        %v1191 = vmul.f32 %v1063, 0.044715
        %v1192 = vmul.f32 %v1064, 0.044715
        %v1193 = vmul.f32 %v1065, 0.044715
        %v1194 = vmul.f32 %v1066, 0.044715
        %v1195 = vmul.f32 %v1067, 0.044715
        %v1196 = vmul.f32 %v1068, 0.044715
        %v1197 = vmul.f32 %v1069, 0.044715
        %v1198 = vmul.f32 %v1070, 0.044715
        %v1199 = vmul.f32 %v1071, 0.044715
        %v1200 = vmul.f32 %v1072, 0.044715
        %v1201 = vmul.f32 %v1073, 0.044715
        %v1202 = vmul.f32 %v1074, 0.044715
        %v1203 = vmul.f32 %v1075, 0.044715
        %v1204 = vmul.f32 %v1076, 0.044715
        %v1205 = vmul.f32 %v1077, 0.044715
        %v1206 = vmul.f32 %v1078, 0.044715
        %v1207 = vmul.f32 %v1079, 0.044715
        %v1208 = vmul.f32 %v1080, 0.044715
        %v1209 = vmul.f32 %v1081, 0.044715
        %v1210 = vmul.f32 %v1082, 0.044715
        %v1211 = vmul.f32 %v1083, 0.044715
        %v1212 = vmul.f32 %v1084, 0.044715
        %v1213 = vmul.f32 %v1085, 0.044715
        %v1214 = vmul.f32 %v1086, 0.044715
        %v1215 = vadd.f32 %v503, %v1087
        %v1216 = vadd.f32 %v672, %v1088
        %v1217 = vadd.f32 %v505, %v1089
        %v1218 = vadd.f32 %v674, %v1090
        %v1219 = vadd.f32 %v508, %v1091
        %v1220 = vadd.f32 %v677, %v1092
        %v1221 = vadd.f32 %v510, %v1093
        %v1222 = vadd.f32 %v679, %v1094
        %v1223 = vadd.f32 %v513, %v1095
        %v1224 = vadd.f32 %v682, %v1096
        %v1225 = vadd.f32 %v515, %v1097
        %v1226 = vadd.f32 %v684, %v1098
        %v1227 = vadd.f32 %v518, %v1099
        %v1228 = vadd.f32 %v687, %v1100
        %v1229 = vadd.f32 %v520, %v1101
        %v1230 = vadd.f32 %v689, %v1102
        %v1231 = vadd.f32 %v523, %v1103
        %v1232 = vadd.f32 %v692, %v1104
        %v1233 = vadd.f32 %v525, %v1105
        %v1234 = vadd.f32 %v694, %v1106
        %v1235 = vadd.f32 %v528, %v1107
        %v1236 = vadd.f32 %v697, %v1108
        %v1237 = vadd.f32 %v530, %v1109
        %v1238 = vadd.f32 %v699, %v1110
        %v1239 = vadd.f32 %v533, %v1111
        %v1240 = vadd.f32 %v702, %v1112
        %v1241 = vadd.f32 %v535, %v1113
        %v1242 = vadd.f32 %v704, %v1114
        %v1243 = vadd.f32 %v538, %v1115
        %v1244 = vadd.f32 %v707, %v1116
        %v1245 = vadd.f32 %v540, %v1117
        %v1246 = vadd.f32 %v709, %v1118
        %v1247 = vadd.f32 %v543, %v1119
        %v1248 = vadd.f32 %v712, %v1120
        %v1249 = vadd.f32 %v545, %v1121
        %v1250 = vadd.f32 %v714, %v1122
        %v1251 = vadd.f32 %v548, %v1123
        %v1252 = vadd.f32 %v717, %v1124
        %v1253 = vadd.f32 %v550, %v1125
        %v1254 = vadd.f32 %v719, %v1126
        %v1255 = vadd.f32 %v553, %v1127
        %v1256 = vadd.f32 %v722, %v1128
        %v1257 = vadd.f32 %v555, %v1129
        %v1258 = vadd.f32 %v724, %v1130
        %v1259 = vadd.f32 %v558, %v1131
        %v1260 = vadd.f32 %v727, %v1132
        %v1261 = vadd.f32 %v560, %v1133
        %v1262 = vadd.f32 %v729, %v1134
        %v1263 = vadd.f32 %v563, %v1135
        %v1264 = vadd.f32 %v732, %v1136
        %v1265 = vadd.f32 %v565, %v1137
        %v1266 = vadd.f32 %v734, %v1138
        %v1267 = vadd.f32 %v568, %v1139
        %v1268 = vadd.f32 %v737, %v1140
        %v1269 = vadd.f32 %v570, %v1141
        %v1270 = vadd.f32 %v739, %v1142
        %v1271 = vadd.f32 %v573, %v1143
        %v1272 = vadd.f32 %v742, %v1144
        %v1273 = vadd.f32 %v575, %v1145
        %v1274 = vadd.f32 %v744, %v1146
        %v1275 = vadd.f32 %v578, %v1147
        %v1276 = vadd.f32 %v747, %v1148
        %v1277 = vadd.f32 %v580, %v1149
        %v1278 = vadd.f32 %v749, %v1150
        %v1279 = vadd.f32 %v583, %v1151
        %v1280 = vadd.f32 %v752, %v1152
        %v1281 = vadd.f32 %v585, %v1153
        %v1282 = vadd.f32 %v754, %v1154
        %v1283 = vadd.f32 %v588, %v1155
        %v1284 = vadd.f32 %v757, %v1156
        %v1285 = vadd.f32 %v590, %v1157
        %v1286 = vadd.f32 %v759, %v1158
        %v1287 = vadd.f32 %v593, %v1159
        %v1288 = vadd.f32 %v762, %v1160
        %v1289 = vadd.f32 %v595, %v1161
        %v1290 = vadd.f32 %v764, %v1162
        %v1291 = vadd.f32 %v598, %v1163
        %v1292 = vadd.f32 %v767, %v1164
        %v1293 = vadd.f32 %v600, %v1165
        %v1294 = vadd.f32 %v769, %v1166
        %v1295 = vadd.f32 %v603, %v1167
        %v1296 = vadd.f32 %v772, %v1168
        %v1297 = vadd.f32 %v605, %v1169
        %v1298 = vadd.f32 %v774, %v1170
        %v1299 = vadd.f32 %v608, %v1171
        %v1300 = vadd.f32 %v777, %v1172
        %v1301 = vadd.f32 %v610, %v1173
        %v1302 = vadd.f32 %v779, %v1174
        %v1303 = vadd.f32 %v613, %v1175
        %v1304 = vadd.f32 %v782, %v1176
        %v1305 = vadd.f32 %v615, %v1177
        %v1306 = vadd.f32 %v784, %v1178
        %v1307 = vadd.f32 %v618, %v1179
        %v1308 = vadd.f32 %v787, %v1180
        %v1309 = vadd.f32 %v620, %v1181
        %v1310 = vadd.f32 %v789, %v1182
        %v1311 = vadd.f32 %v623, %v1183
        %v1312 = vadd.f32 %v792, %v1184
        %v1313 = vadd.f32 %v625, %v1185
        %v1314 = vadd.f32 %v794, %v1186
        %v1315 = vadd.f32 %v628, %v1187
        %v1316 = vadd.f32 %v797, %v1188
        %v1317 = vadd.f32 %v630, %v1189
        %v1318 = vadd.f32 %v799, %v1190
        %v1319 = vadd.f32 %v633, %v1191
        %v1320 = vadd.f32 %v802, %v1192
        %v1321 = vadd.f32 %v635, %v1193
        %v1322 = vadd.f32 %v804, %v1194
        %v1323 = vadd.f32 %v638, %v1195
        %v1324 = vadd.f32 %v807, %v1196
        %v1325 = vadd.f32 %v640, %v1197
        %v1326 = vadd.f32 %v809, %v1198
        %v1327 = vadd.f32 %v643, %v1199
        %v1328 = vadd.f32 %v812, %v1200
        %v1329 = vadd.f32 %v645, %v1201
        %v1330 = vadd.f32 %v814, %v1202
        %v1331 = vadd.f32 %v648, %v1203
        %v1332 = vadd.f32 %v817, %v1204
        %v1333 = vadd.f32 %v650, %v1205
        %v1334 = vadd.f32 %v819, %v1206
        %v1335 = vadd.f32 %v653, %v1207
        %v1336 = vadd.f32 %v822, %v1208
        %v1337 = vadd.f32 %v655, %v1209
        %v1338 = vadd.f32 %v824, %v1210
        %v1339 = vadd.f32 %v658, %v1211
        %v1340 = vadd.f32 %v827, %v1212
        %v1341 = vadd.f32 %v660, %v1213
        %v1342 = vadd.f32 %v829, %v1214
        %v1343 = vmul.f32 %v1215, 0.7978846
        %v1344 = vmul.f32 %v1216, 0.7978846
        %v1345 = vmul.f32 %v1217, 0.7978846
        %v1346 = vmul.f32 %v1218, 0.7978846
        %v1347 = vmul.f32 %v1219, 0.7978846
        %v1348 = vmul.f32 %v1220, 0.7978846
        %v1349 = vmul.f32 %v1221, 0.7978846
        %v1350 = vmul.f32 %v1222, 0.7978846
        %v1351 = vmul.f32 %v1223, 0.7978846
        %v1352 = vmul.f32 %v1224, 0.7978846
        %v1353 = vmul.f32 %v1225, 0.7978846
        %v1354 = vmul.f32 %v1226, 0.7978846
        %v1355 = vmul.f32 %v1227, 0.7978846
        %v1356 = vmul.f32 %v1228, 0.7978846
        %v1357 = vmul.f32 %v1229, 0.7978846
        %v1358 = vmul.f32 %v1230, 0.7978846
        %v1359 = vmul.f32 %v1231, 0.7978846
        %v1360 = vmul.f32 %v1232, 0.7978846
        %v1361 = vmul.f32 %v1233, 0.7978846
        %v1362 = vmul.f32 %v1234, 0.7978846
        %v1363 = vmul.f32 %v1235, 0.7978846
        %v1364 = vmul.f32 %v1236, 0.7978846
        %v1365 = vmul.f32 %v1237, 0.7978846
        %v1366 = vmul.f32 %v1238, 0.7978846
        %v1367 = vmul.f32 %v1239, 0.7978846
        %v1368 = vmul.f32 %v1240, 0.7978846
        %v1369 = vmul.f32 %v1241, 0.7978846
        %v1370 = vmul.f32 %v1242, 0.7978846
        %v1371 = vmul.f32 %v1243, 0.7978846
        %v1372 = vmul.f32 %v1244, 0.7978846
        %v1373 = vmul.f32 %v1245, 0.7978846
        %v1374 = vmul.f32 %v1246, 0.7978846
        %v1375 = vmul.f32 %v1247, 0.7978846
        %v1376 = vmul.f32 %v1248, 0.7978846
        %v1377 = vmul.f32 %v1249, 0.7978846
        %v1378 = vmul.f32 %v1250, 0.7978846
        %v1379 = vmul.f32 %v1251, 0.7978846
        %v1380 = vmul.f32 %v1252, 0.7978846
        %v1381 = vmul.f32 %v1253, 0.7978846
        %v1382 = vmul.f32 %v1254, 0.7978846
        %v1383 = vmul.f32 %v1255, 0.7978846
        %v1384 = vmul.f32 %v1256, 0.7978846
        %v1385 = vmul.f32 %v1257, 0.7978846
        %v1386 = vmul.f32 %v1258, 0.7978846
        %v1387 = vmul.f32 %v1259, 0.7978846
        %v1388 = vmul.f32 %v1260, 0.7978846
        %v1389 = vmul.f32 %v1261, 0.7978846
        %v1390 = vmul.f32 %v1262, 0.7978846
        %v1391 = vmul.f32 %v1263, 0.7978846
        %v1392 = vmul.f32 %v1264, 0.7978846
        %v1393 = vmul.f32 %v1265, 0.7978846
        %v1394 = vmul.f32 %v1266, 0.7978846
        %v1395 = vmul.f32 %v1267, 0.7978846
        %v1396 = vmul.f32 %v1268, 0.7978846
        %v1397 = vmul.f32 %v1269, 0.7978846
        %v1398 = vmul.f32 %v1270, 0.7978846
        %v1399 = vmul.f32 %v1271, 0.7978846
        %v1400 = vmul.f32 %v1272, 0.7978846
        %v1401 = vmul.f32 %v1273, 0.7978846
        %v1402 = vmul.f32 %v1274, 0.7978846
        %v1403 = vmul.f32 %v1275, 0.7978846
        %v1404 = vmul.f32 %v1276, 0.7978846
        %v1405 = vmul.f32 %v1277, 0.7978846
        %v1406 = vmul.f32 %v1278, 0.7978846
        %v1407 = vmul.f32 %v1279, 0.7978846
        %v1408 = vmul.f32 %v1280, 0.7978846
        %v1409 = vmul.f32 %v1281, 0.7978846
        %v1410 = vmul.f32 %v1282, 0.7978846
        %v1411 = vmul.f32 %v1283, 0.7978846
        %v1412 = vmul.f32 %v1284, 0.7978846
        %v1413 = vmul.f32 %v1285, 0.7978846
        %v1414 = vmul.f32 %v1286, 0.7978846
        %v1415 = vmul.f32 %v1287, 0.7978846
        %v1416 = vmul.f32 %v1288, 0.7978846
        %v1417 = vmul.f32 %v1289, 0.7978846
        %v1418 = vmul.f32 %v1290, 0.7978846
        %v1419 = vmul.f32 %v1291, 0.7978846
        %v1420 = vmul.f32 %v1292, 0.7978846
        %v1421 = vmul.f32 %v1293, 0.7978846
        %v1422 = vmul.f32 %v1294, 0.7978846
        %v1423 = vmul.f32 %v1295, 0.7978846
        %v1424 = vmul.f32 %v1296, 0.7978846
        %v1425 = vmul.f32 %v1297, 0.7978846
        %v1426 = vmul.f32 %v1298, 0.7978846
        %v1427 = vmul.f32 %v1299, 0.7978846
        %v1428 = vmul.f32 %v1300, 0.7978846
        %v1429 = vmul.f32 %v1301, 0.7978846
        %v1430 = vmul.f32 %v1302, 0.7978846
        %v1431 = vmul.f32 %v1303, 0.7978846
        %v1432 = vmul.f32 %v1304, 0.7978846
        %v1433 = vmul.f32 %v1305, 0.7978846
        %v1434 = vmul.f32 %v1306, 0.7978846
        %v1435 = vmul.f32 %v1307, 0.7978846
        %v1436 = vmul.f32 %v1308, 0.7978846
        %v1437 = vmul.f32 %v1309, 0.7978846
        %v1438 = vmul.f32 %v1310, 0.7978846
        %v1439 = vmul.f32 %v1311, 0.7978846
        %v1440 = vmul.f32 %v1312, 0.7978846
        %v1441 = vmul.f32 %v1313, 0.7978846
        %v1442 = vmul.f32 %v1314, 0.7978846
        %v1443 = vmul.f32 %v1315, 0.7978846
        %v1444 = vmul.f32 %v1316, 0.7978846
        %v1445 = vmul.f32 %v1317, 0.7978846
        %v1446 = vmul.f32 %v1318, 0.7978846
        %v1447 = vmul.f32 %v1319, 0.7978846
        %v1448 = vmul.f32 %v1320, 0.7978846
        %v1449 = vmul.f32 %v1321, 0.7978846
        %v1450 = vmul.f32 %v1322, 0.7978846
        %v1451 = vmul.f32 %v1323, 0.7978846
        %v1452 = vmul.f32 %v1324, 0.7978846
        %v1453 = vmul.f32 %v1325, 0.7978846
        %v1454 = vmul.f32 %v1326, 0.7978846
        %v1455 = vmul.f32 %v1327, 0.7978846
        %v1456 = vmul.f32 %v1328, 0.7978846
        %v1457 = vmul.f32 %v1329, 0.7978846
        %v1458 = vmul.f32 %v1330, 0.7978846
        %v1459 = vmul.f32 %v1331, 0.7978846
        %v1460 = vmul.f32 %v1332, 0.7978846
        %v1461 = vmul.f32 %v1333, 0.7978846
        %v1462 = vmul.f32 %v1334, 0.7978846
        %v1463 = vmul.f32 %v1335, 0.7978846
        %v1464 = vmul.f32 %v1336, 0.7978846
        %v1465 = vmul.f32 %v1337, 0.7978846
        %v1466 = vmul.f32 %v1338, 0.7978846
        %v1467 = vmul.f32 %v1339, 0.7978846
        %v1468 = vmul.f32 %v1340, 0.7978846
        %v1469 = vmul.f32 %v1341, 0.7978846
        %v1470 = vmul.f32 %v1342, 0.7978846
        %v1471 = vtanh.pop %v1343
        %v1472 = vtanh.pop %v1344
        %v1473 = vtanh.pop %v1345
        %v1474 = vtanh.pop %v1346
        %v1475 = vtanh.pop %v1347
        %v1476 = vtanh.pop %v1348
        %v1477 = vtanh.pop %v1349
        %v1478 = vtanh.pop %v1350
        %v1479 = vtanh.pop %v1351
        %v1480 = vtanh.pop %v1352
        %v1481 = vtanh.pop %v1353
        %v1482 = vtanh.pop %v1354
        %v1483 = vtanh.pop %v1355
        %v1484 = vtanh.pop %v1356
        %v1485 = vtanh.pop %v1357
        %v1486 = vtanh.pop %v1358
        %v1487 = vtanh.pop %v1359
        %v1488 = vtanh.pop %v1360
        %v1489 = vtanh.pop %v1361
        %v1490 = vtanh.pop %v1362
        %v1491 = vtanh.pop %v1363
        %v1492 = vtanh.pop %v1364
        %v1493 = vtanh.pop %v1365
        %v1494 = vtanh.pop %v1366
        %v1495 = vtanh.pop %v1367
        %v1496 = vtanh.pop %v1368
        %v1497 = vtanh.pop %v1369
        %v1498 = vtanh.pop %v1370
        %v1499 = vtanh.pop %v1371
        %v1500 = vtanh.pop %v1372
        %v1501 = vtanh.pop %v1373
        %v1502 = vtanh.pop %v1374
        %v1503 = vtanh.pop %v1375
        %v1504 = vtanh.pop %v1376
        %v1505 = vtanh.pop %v1377
        %v1506 = vtanh.pop %v1378
        %v1507 = vtanh.pop %v1379
        %v1508 = vtanh.pop %v1380
        %v1509 = vtanh.pop %v1381
        %v1510 = vtanh.pop %v1382
        %v1511 = vtanh.pop %v1383
        %v1512 = vtanh.pop %v1384
        %v1513 = vtanh.pop %v1385
        %v1514 = vtanh.pop %v1386
        %v1515 = vtanh.pop %v1387
        %v1516 = vtanh.pop %v1388
        %v1517 = vtanh.pop %v1389
        %v1518 = vtanh.pop %v1390
        %v1519 = vtanh.pop %v1391
        %v1520 = vtanh.pop %v1392
        %v1521 = vtanh.pop %v1393
        %v1522 = vtanh.pop %v1394
        %v1523 = vtanh.pop %v1395
        %v1524 = vtanh.pop %v1396
        %v1525 = vtanh.pop %v1397
        %v1526 = vtanh.pop %v1398
        %v1527 = vtanh.pop %v1399
        %v1528 = vtanh.pop %v1400
        %v1529 = vtanh.pop %v1401
        %v1530 = vtanh.pop %v1402
        %v1531 = vtanh.pop %v1403
        %v1532 = vtanh.pop %v1404
        %v1533 = vtanh.pop %v1405
        %v1534 = vtanh.pop %v1406
        %v1535 = vtanh.pop %v1407
        %v1536 = vtanh.pop %v1408
        %v1537 = vtanh.pop %v1409
        %v1538 = vtanh.pop %v1410
        %v1539 = vtanh.pop %v1411
        %v1540 = vtanh.pop %v1412
        %v1541 = vtanh.pop %v1413
        %v1542 = vtanh.pop %v1414
        %v1543 = vtanh.pop %v1415
        %v1544 = vtanh.pop %v1416
        %v1545 = vtanh.pop %v1417
        %v1546 = vtanh.pop %v1418
        %v1547 = vtanh.pop %v1419
        %v1548 = vtanh.pop %v1420
        %v1549 = vtanh.pop %v1421
        %v1550 = vtanh.pop %v1422
        %v1551 = vtanh.pop %v1423
        %v1552 = vtanh.pop %v1424
        %v1553 = vtanh.pop %v1425
        %v1554 = vtanh.pop %v1426
        %v1555 = vtanh.pop %v1427
        %v1556 = vtanh.pop %v1428
        %v1557 = vtanh.pop %v1429
        %v1558 = vtanh.pop %v1430
        %v1559 = vtanh.pop %v1431
        %v1560 = vtanh.pop %v1432
        %v1561 = vtanh.pop %v1433
        %v1562 = vtanh.pop %v1434
        %v1563 = vtanh.pop %v1435
        %v1564 = vtanh.pop %v1436
        %v1565 = vtanh.pop %v1437
        %v1566 = vtanh.pop %v1438
        %v1567 = vtanh.pop %v1439
        %v1568 = vtanh.pop %v1440
        %v1569 = vtanh.pop %v1441
        %v1570 = vtanh.pop %v1442
        %v1571 = vtanh.pop %v1443
        %v1572 = vtanh.pop %v1444
        %v1573 = vtanh.pop %v1445
        %v1574 = vtanh.pop %v1446
        %v1575 = vtanh.pop %v1447
        %v1576 = vtanh.pop %v1448
        %v1577 = vtanh.pop %v1449
        %v1578 = vtanh.pop %v1450
        %v1579 = vtanh.pop %v1451
        %v1580 = vtanh.pop %v1452
        %v1581 = vtanh.pop %v1453
        %v1582 = vtanh.pop %v1454
        %v1583 = vtanh.pop %v1455
        %v1584 = vtanh.pop %v1456
        %v1585 = vtanh.pop %v1457
        %v1586 = vtanh.pop %v1458
        %v1587 = vtanh.pop %v1459
        %v1588 = vtanh.pop %v1460
        %v1589 = vtanh.pop %v1461
        %v1590 = vtanh.pop %v1462
        %v1591 = vtanh.pop %v1463
        %v1592 = vtanh.pop %v1464
        %v1593 = vtanh.pop %v1465
        %v1594 = vtanh.pop %v1466
        %v1595 = vtanh.pop %v1467
        %v1596 = vtanh.pop %v1468
        %v1597 = vtanh.pop %v1469
        %v1598 = vtanh.pop %v1470
        %v1599 = vadd.f32 %v1471, 1.0
        %v1600 = vadd.f32 %v1472, 1.0
        %v1601 = vadd.f32 %v1473, 1.0
        %v1602 = vadd.f32 %v1474, 1.0
        %v1603 = vadd.f32 %v1475, 1.0
        %v1604 = vadd.f32 %v1476, 1.0
        %v1605 = vadd.f32 %v1477, 1.0
        %v1606 = vadd.f32 %v1478, 1.0
        %v1607 = vadd.f32 %v1479, 1.0
        %v1608 = vadd.f32 %v1480, 1.0
        %v1609 = vadd.f32 %v1481, 1.0
        %v1610 = vadd.f32 %v1482, 1.0
        %v1611 = vadd.f32 %v1483, 1.0
        %v1612 = vadd.f32 %v1484, 1.0
        %v1613 = vadd.f32 %v1485, 1.0
        %v1614 = vadd.f32 %v1486, 1.0
        %v1615 = vadd.f32 %v1487, 1.0
        %v1616 = vadd.f32 %v1488, 1.0
        %v1617 = vadd.f32 %v1489, 1.0
        %v1618 = vadd.f32 %v1490, 1.0
        %v1619 = vadd.f32 %v1491, 1.0
        %v1620 = vadd.f32 %v1492, 1.0
        %v1621 = vadd.f32 %v1493, 1.0
        %v1622 = vadd.f32 %v1494, 1.0
        %v1623 = vadd.f32 %v1495, 1.0
        %v1624 = vadd.f32 %v1496, 1.0
        %v1625 = vadd.f32 %v1497, 1.0
        %v1626 = vadd.f32 %v1498, 1.0
        %v1627 = vadd.f32 %v1499, 1.0
        %v1628 = vadd.f32 %v1500, 1.0
        %v1629 = vadd.f32 %v1501, 1.0
        %v1630 = vadd.f32 %v1502, 1.0
        %v1631 = vadd.f32 %v1503, 1.0
        %v1632 = vadd.f32 %v1504, 1.0
        %v1633 = vadd.f32 %v1505, 1.0
        %v1634 = vadd.f32 %v1506, 1.0
        %v1635 = vadd.f32 %v1507, 1.0
        %v1636 = vadd.f32 %v1508, 1.0
        %v1637 = vadd.f32 %v1509, 1.0
        %v1638 = vadd.f32 %v1510, 1.0
        %v1639 = vadd.f32 %v1511, 1.0
        %v1640 = vadd.f32 %v1512, 1.0
        %v1641 = vadd.f32 %v1513, 1.0
        %v1642 = vadd.f32 %v1514, 1.0
        %v1643 = vadd.f32 %v1515, 1.0
        %v1644 = vadd.f32 %v1516, 1.0
        %v1645 = vadd.f32 %v1517, 1.0
        %v1646 = vadd.f32 %v1518, 1.0
        %v1647 = vadd.f32 %v1519, 1.0
        %v1648 = vadd.f32 %v1520, 1.0
        %v1649 = vadd.f32 %v1521, 1.0
        %v1650 = vadd.f32 %v1522, 1.0
        %v1651 = vadd.f32 %v1523, 1.0
        %v1652 = vadd.f32 %v1524, 1.0
        %v1653 = vadd.f32 %v1525, 1.0
        %v1654 = vadd.f32 %v1526, 1.0
        %v1655 = vadd.f32 %v1527, 1.0
        %v1656 = vadd.f32 %v1528, 1.0
        %v1657 = vadd.f32 %v1529, 1.0
        %v1658 = vadd.f32 %v1530, 1.0
        %v1659 = vadd.f32 %v1531, 1.0
        %v1660 = vadd.f32 %v1532, 1.0
        %v1661 = vadd.f32 %v1533, 1.0
        %v1662 = vadd.f32 %v1534, 1.0
        %v1663 = vadd.f32 %v1535, 1.0
        %v1664 = vadd.f32 %v1536, 1.0
        %v1665 = vadd.f32 %v1537, 1.0
        %v1666 = vadd.f32 %v1538, 1.0
        %v1667 = vadd.f32 %v1539, 1.0
        %v1668 = vadd.f32 %v1540, 1.0
        %v1669 = vadd.f32 %v1541, 1.0
        %v1670 = vadd.f32 %v1542, 1.0
        %v1671 = vadd.f32 %v1543, 1.0
        %v1672 = vadd.f32 %v1544, 1.0
        %v1673 = vadd.f32 %v1545, 1.0
        %v1674 = vadd.f32 %v1546, 1.0
        %v1675 = vadd.f32 %v1547, 1.0
        %v1676 = vadd.f32 %v1548, 1.0
        %v1677 = vadd.f32 %v1549, 1.0
        %v1678 = vadd.f32 %v1550, 1.0
        %v1679 = vadd.f32 %v1551, 1.0
        %v1680 = vadd.f32 %v1552, 1.0
        %v1681 = vadd.f32 %v1553, 1.0
        %v1682 = vadd.f32 %v1554, 1.0
        %v1683 = vadd.f32 %v1555, 1.0
        %v1684 = vadd.f32 %v1556, 1.0
        %v1685 = vadd.f32 %v1557, 1.0
        %v1686 = vadd.f32 %v1558, 1.0
        %v1687 = vadd.f32 %v1559, 1.0
        %v1688 = vadd.f32 %v1560, 1.0
        %v1689 = vadd.f32 %v1561, 1.0
        %v1690 = vadd.f32 %v1562, 1.0
        %v1691 = vadd.f32 %v1563, 1.0
        %v1692 = vadd.f32 %v1564, 1.0
        %v1693 = vadd.f32 %v1565, 1.0
        %v1694 = vadd.f32 %v1566, 1.0
        %v1695 = vadd.f32 %v1567, 1.0
        %v1696 = vadd.f32 %v1568, 1.0
        %v1697 = vadd.f32 %v1569, 1.0
        %v1698 = vadd.f32 %v1570, 1.0
        %v1699 = vadd.f32 %v1571, 1.0
        %v1700 = vadd.f32 %v1572, 1.0
        %v1701 = vadd.f32 %v1573, 1.0
        %v1702 = vadd.f32 %v1574, 1.0
        %v1703 = vadd.f32 %v1575, 1.0
        %v1704 = vadd.f32 %v1576, 1.0
        %v1705 = vadd.f32 %v1577, 1.0
        %v1706 = vadd.f32 %v1578, 1.0
        %v1707 = vadd.f32 %v1579, 1.0
        %v1708 = vadd.f32 %v1580, 1.0
        %v1709 = vadd.f32 %v1581, 1.0
        %v1710 = vadd.f32 %v1582, 1.0
        %v1711 = vadd.f32 %v1583, 1.0
        %v1712 = vadd.f32 %v1584, 1.0
        %v1713 = vadd.f32 %v1585, 1.0
        %v1714 = vadd.f32 %v1586, 1.0
        %v1715 = vadd.f32 %v1587, 1.0
        %v1716 = vadd.f32 %v1588, 1.0
        %v1717 = vadd.f32 %v1589, 1.0
        %v1718 = vadd.f32 %v1590, 1.0
        %v1719 = vadd.f32 %v1591, 1.0
        %v1720 = vadd.f32 %v1592, 1.0
        %v1721 = vadd.f32 %v1593, 1.0
        %v1722 = vadd.f32 %v1594, 1.0
        %v1723 = vadd.f32 %v1595, 1.0
        %v1724 = vadd.f32 %v1596, 1.0
        %v1725 = vadd.f32 %v1597, 1.0
        %v1726 = vadd.f32 %v1598, 1.0
        %v1727 = vmul.f32 %v1599, 0.5
        %v1728 = vmul.f32 %v1600, 0.5
        %v1729 = vmul.f32 %v1601, 0.5
        %v1730 = vmul.f32 %v1602, 0.5
        %v1731 = vmul.f32 %v1603, 0.5
        %v1732 = vmul.f32 %v1604, 0.5
        %v1733 = vmul.f32 %v1605, 0.5
        %v1734 = vmul.f32 %v1606, 0.5
        %v1735 = vmul.f32 %v1607, 0.5
        %v1736 = vmul.f32 %v1608, 0.5
        %v1737 = vmul.f32 %v1609, 0.5
        %v1738 = vmul.f32 %v1610, 0.5
        %v1739 = vmul.f32 %v1611, 0.5
        %v1740 = vmul.f32 %v1612, 0.5
        %v1741 = vmul.f32 %v1613, 0.5
        %v1742 = vmul.f32 %v1614, 0.5
        %v1743 = vmul.f32 %v1615, 0.5
        %v1744 = vmul.f32 %v1616, 0.5
        %v1745 = vmul.f32 %v1617, 0.5
        %v1746 = vmul.f32 %v1618, 0.5
        %v1747 = vmul.f32 %v1619, 0.5
        %v1748 = vmul.f32 %v1620, 0.5
        %v1749 = vmul.f32 %v1621, 0.5
        %v1750 = vmul.f32 %v1622, 0.5
        %v1751 = vmul.f32 %v1623, 0.5
        %v1752 = vmul.f32 %v1624, 0.5
        %v1753 = vmul.f32 %v1625, 0.5
        %v1754 = vmul.f32 %v1626, 0.5
        %v1755 = vmul.f32 %v1627, 0.5
        %v1756 = vmul.f32 %v1628, 0.5
        %v1757 = vmul.f32 %v1629, 0.5
        %v1758 = vmul.f32 %v1630, 0.5
        %v1759 = vmul.f32 %v1631, 0.5
        %v1760 = vmul.f32 %v1632, 0.5
        %v1761 = vmul.f32 %v1633, 0.5
        %v1762 = vmul.f32 %v1634, 0.5
        %v1763 = vmul.f32 %v1635, 0.5
        %v1764 = vmul.f32 %v1636, 0.5
        %v1765 = vmul.f32 %v1637, 0.5
        %v1766 = vmul.f32 %v1638, 0.5
        %v1767 = vmul.f32 %v1639, 0.5
        %v1768 = vmul.f32 %v1640, 0.5
        %v1769 = vmul.f32 %v1641, 0.5
        %v1770 = vmul.f32 %v1642, 0.5
        %v1771 = vmul.f32 %v1643, 0.5
        %v1772 = vmul.f32 %v1644, 0.5
        %v1773 = vmul.f32 %v1645, 0.5
        %v1774 = vmul.f32 %v1646, 0.5
        %v1775 = vmul.f32 %v1647, 0.5
        %v1776 = vmul.f32 %v1648, 0.5
        %v1777 = vmul.f32 %v1649, 0.5
        %v1778 = vmul.f32 %v1650, 0.5
        %v1779 = vmul.f32 %v1651, 0.5
        %v1780 = vmul.f32 %v1652, 0.5
        %v1781 = vmul.f32 %v1653, 0.5
        %v1782 = vmul.f32 %v1654, 0.5
        %v1783 = vmul.f32 %v1655, 0.5
        %v1784 = vmul.f32 %v1656, 0.5
        %v1785 = vmul.f32 %v1657, 0.5
        %v1786 = vmul.f32 %v1658, 0.5
        %v1787 = vmul.f32 %v1659, 0.5
        %v1788 = vmul.f32 %v1660, 0.5
        %v1789 = vmul.f32 %v1661, 0.5
        %v1790 = vmul.f32 %v1662, 0.5
        %v1791 = vmul.f32 %v1663, 0.5
        %v1792 = vmul.f32 %v1664, 0.5
        %v1793 = vmul.f32 %v1665, 0.5
        %v1794 = vmul.f32 %v1666, 0.5
        %v1795 = vmul.f32 %v1667, 0.5
        %v1796 = vmul.f32 %v1668, 0.5
        %v1797 = vmul.f32 %v1669, 0.5
        %v1798 = vmul.f32 %v1670, 0.5
        %v1799 = vmul.f32 %v1671, 0.5
        %v1800 = vmul.f32 %v1672, 0.5
        %v1801 = vmul.f32 %v1673, 0.5
        %v1802 = vmul.f32 %v1674, 0.5
        %v1803 = vmul.f32 %v1675, 0.5
        %v1804 = vmul.f32 %v1676, 0.5
        %v1805 = vmul.f32 %v1677, 0.5
        %v1806 = vmul.f32 %v1678, 0.5
        %v1807 = vmul.f32 %v1679, 0.5
        %v1808 = vmul.f32 %v1680, 0.5
        %v1809 = vmul.f32 %v1681, 0.5
        %v1810 = vmul.f32 %v1682, 0.5
        %v1811 = vmul.f32 %v1683, 0.5
        %v1812 = vmul.f32 %v1684, 0.5
        %v1813 = vmul.f32 %v1685, 0.5
        %v1814 = vmul.f32 %v1686, 0.5
        %v1815 = vmul.f32 %v1687, 0.5
        %v1816 = vmul.f32 %v1688, 0.5
        %v1817 = vmul.f32 %v1689, 0.5
        %v1818 = vmul.f32 %v1690, 0.5
        %v1819 = vmul.f32 %v1691, 0.5
        %v1820 = vmul.f32 %v1692, 0.5
        %v1821 = vmul.f32 %v1693, 0.5
        %v1822 = vmul.f32 %v1694, 0.5
        %v1823 = vmul.f32 %v1695, 0.5
        %v1824 = vmul.f32 %v1696, 0.5
        %v1825 = vmul.f32 %v1697, 0.5
        %v1826 = vmul.f32 %v1698, 0.5
        %v1827 = vmul.f32 %v1699, 0.5
        %v1828 = vmul.f32 %v1700, 0.5
        %v1829 = vmul.f32 %v1701, 0.5
        %v1830 = vmul.f32 %v1702, 0.5
        %v1831 = vmul.f32 %v1703, 0.5
        %v1832 = vmul.f32 %v1704, 0.5
        %v1833 = vmul.f32 %v1705, 0.5
        %v1834 = vmul.f32 %v1706, 0.5
        %v1835 = vmul.f32 %v1707, 0.5
        %v1836 = vmul.f32 %v1708, 0.5
        %v1837 = vmul.f32 %v1709, 0.5
        %v1838 = vmul.f32 %v1710, 0.5
        %v1839 = vmul.f32 %v1711, 0.5
        %v1840 = vmul.f32 %v1712, 0.5
        %v1841 = vmul.f32 %v1713, 0.5
        %v1842 = vmul.f32 %v1714, 0.5
        %v1843 = vmul.f32 %v1715, 0.5
        %v1844 = vmul.f32 %v1716, 0.5
        %v1845 = vmul.f32 %v1717, 0.5
        %v1846 = vmul.f32 %v1718, 0.5
        %v1847 = vmul.f32 %v1719, 0.5
        %v1848 = vmul.f32 %v1720, 0.5
        %v1849 = vmul.f32 %v1721, 0.5
        %v1850 = vmul.f32 %v1722, 0.5
        %v1851 = vmul.f32 %v1723, 0.5
        %v1852 = vmul.f32 %v1724, 0.5
        %v1853 = vmul.f32 %v1725, 0.5
        %v1854 = vmul.f32 %v1726, 0.5
        %v1855 = vmul.f32 %v503, %v1727
        %v1856 = vmul.f32 %v672, %v1728
        %v1857 = vmul.f32 %v505, %v1729
        %v1858 = vmul.f32 %v674, %v1730
        %v1859 = vmul.f32 %v508, %v1731
        %v1860 = vmul.f32 %v677, %v1732
        %v1861 = vmul.f32 %v510, %v1733
        %v1862 = vmul.f32 %v679, %v1734
        %v1863 = vmul.f32 %v513, %v1735
        %v1864 = vmul.f32 %v682, %v1736
        %v1865 = vmul.f32 %v515, %v1737
        %v1866 = vmul.f32 %v684, %v1738
        %v1867 = vmul.f32 %v518, %v1739
        %v1868 = vmul.f32 %v687, %v1740
        %v1869 = vmul.f32 %v520, %v1741
        %v1870 = vmul.f32 %v689, %v1742
        %v1871 = vmul.f32 %v523, %v1743
        %v1872 = vmul.f32 %v692, %v1744
        %v1873 = vmul.f32 %v525, %v1745
        %v1874 = vmul.f32 %v694, %v1746
        %v1875 = vmul.f32 %v528, %v1747
        %v1876 = vmul.f32 %v697, %v1748
        %v1877 = vmul.f32 %v530, %v1749
        %v1878 = vmul.f32 %v699, %v1750
        %v1879 = vmul.f32 %v533, %v1751
        %v1880 = vmul.f32 %v702, %v1752
        %v1881 = vmul.f32 %v535, %v1753
        %v1882 = vmul.f32 %v704, %v1754
        %v1883 = vmul.f32 %v538, %v1755
        %v1884 = vmul.f32 %v707, %v1756
        %v1885 = vmul.f32 %v540, %v1757
        %v1886 = vmul.f32 %v709, %v1758
        %v1887 = vmul.f32 %v543, %v1759
        %v1888 = vmul.f32 %v712, %v1760
        %v1889 = vmul.f32 %v545, %v1761
        %v1890 = vmul.f32 %v714, %v1762
        %v1891 = vmul.f32 %v548, %v1763
        %v1892 = vmul.f32 %v717, %v1764
        %v1893 = vmul.f32 %v550, %v1765
        %v1894 = vmul.f32 %v719, %v1766
        %v1895 = vmul.f32 %v553, %v1767
        %v1896 = vmul.f32 %v722, %v1768
        %v1897 = vmul.f32 %v555, %v1769
        %v1898 = vmul.f32 %v724, %v1770
        %v1899 = vmul.f32 %v558, %v1771
        %v1900 = vmul.f32 %v727, %v1772
        %v1901 = vmul.f32 %v560, %v1773
        %v1902 = vmul.f32 %v729, %v1774
        %v1903 = vmul.f32 %v563, %v1775
        %v1904 = vmul.f32 %v732, %v1776
        %v1905 = vmul.f32 %v565, %v1777
        %v1906 = vmul.f32 %v734, %v1778
        %v1907 = vmul.f32 %v568, %v1779
        %v1908 = vmul.f32 %v737, %v1780
        %v1909 = vmul.f32 %v570, %v1781
        %v1910 = vmul.f32 %v739, %v1782
        %v1911 = vmul.f32 %v573, %v1783
        %v1912 = vmul.f32 %v742, %v1784
        %v1913 = vmul.f32 %v575, %v1785
        %v1914 = vmul.f32 %v744, %v1786
        %v1915 = vmul.f32 %v578, %v1787
        %v1916 = vmul.f32 %v747, %v1788
        %v1917 = vmul.f32 %v580, %v1789
        %v1918 = vmul.f32 %v749, %v1790
        %v1919 = vmul.f32 %v583, %v1791
        %v1920 = vmul.f32 %v752, %v1792
        %v1921 = vmul.f32 %v585, %v1793
        %v1922 = vmul.f32 %v754, %v1794
        %v1923 = vmul.f32 %v588, %v1795
        %v1924 = vmul.f32 %v757, %v1796
        %v1925 = vmul.f32 %v590, %v1797
        %v1926 = vmul.f32 %v759, %v1798
        %v1927 = vmul.f32 %v593, %v1799
        %v1928 = vmul.f32 %v762, %v1800
        %v1929 = vmul.f32 %v595, %v1801
        %v1930 = vmul.f32 %v764, %v1802
        %v1931 = vmul.f32 %v598, %v1803
        %v1932 = vmul.f32 %v767, %v1804
        %v1933 = vmul.f32 %v600, %v1805
        %v1934 = vmul.f32 %v769, %v1806
        %v1935 = vmul.f32 %v603, %v1807
        %v1936 = vmul.f32 %v772, %v1808
        %v1937 = vmul.f32 %v605, %v1809
        %v1938 = vmul.f32 %v774, %v1810
        %v1939 = vmul.f32 %v608, %v1811
        %v1940 = vmul.f32 %v777, %v1812
        %v1941 = vmul.f32 %v610, %v1813
        %v1942 = vmul.f32 %v779, %v1814
        %v1943 = vmul.f32 %v613, %v1815
        %v1944 = vmul.f32 %v782, %v1816
        %v1945 = vmul.f32 %v615, %v1817
        %v1946 = vmul.f32 %v784, %v1818
        %v1947 = vmul.f32 %v618, %v1819
        %v1948 = vmul.f32 %v787, %v1820
        %v1949 = vmul.f32 %v620, %v1821
        %v1950 = vmul.f32 %v789, %v1822
        %v1951 = vmul.f32 %v623, %v1823
        %v1952 = vmul.f32 %v792, %v1824
        %v1953 = vmul.f32 %v625, %v1825
        %v1954 = vmul.f32 %v794, %v1826
        %v1955 = vmul.f32 %v628, %v1827
        %v1956 = vmul.f32 %v797, %v1828
        %v1957 = vmul.f32 %v630, %v1829
        %v1958 = vmul.f32 %v799, %v1830
        %v1959 = vmul.f32 %v633, %v1831
        %v1960 = vmul.f32 %v802, %v1832
        %v1961 = vmul.f32 %v635, %v1833
        %v1962 = vmul.f32 %v804, %v1834
        %v1963 = vmul.f32 %v638, %v1835
        %v1964 = vmul.f32 %v807, %v1836
        %v1965 = vmul.f32 %v640, %v1837
        %v1966 = vmul.f32 %v809, %v1838
        %v1967 = vmul.f32 %v643, %v1839
        %v1968 = vmul.f32 %v812, %v1840
        %v1969 = vmul.f32 %v645, %v1841
        %v1970 = vmul.f32 %v814, %v1842
        %v1971 = vmul.f32 %v648, %v1843
        %v1972 = vmul.f32 %v817, %v1844
        %v1973 = vmul.f32 %v650, %v1845
        %v1974 = vmul.f32 %v819, %v1846
        %v1975 = vmul.f32 %v653, %v1847
        %v1976 = vmul.f32 %v822, %v1848
        %v1977 = vmul.f32 %v655, %v1849
        %v1978 = vmul.f32 %v824, %v1850
        %v1979 = vmul.f32 %v658, %v1851
        %v1980 = vmul.f32 %v827, %v1852
        %v1981 = vmul.f32 %v660, %v1853
        %v1982 = vmul.f32 %v829, %v1854
        %v1983 = vpack.c.bf16 %v1857, %v1855
        %v1984 = vpack.c.bf16 %v1858, %v1856
        %v1985 = vpack.c.bf16 %v1861, %v1859
        %v1986 = vpack.c.bf16 %v1862, %v1860
        %v1987 = vpack.c.bf16 %v1865, %v1863
        %v1988 = vpack.c.bf16 %v1866, %v1864
        %v1989 = vpack.c.bf16 %v1869, %v1867
        %v1990 = vpack.c.bf16 %v1870, %v1868
        %v1991 = vpack.c.bf16 %v1873, %v1871
        %v1992 = vpack.c.bf16 %v1874, %v1872
        %v1993 = vpack.c.bf16 %v1877, %v1875
        %v1994 = vpack.c.bf16 %v1878, %v1876
        %v1995 = vpack.c.bf16 %v1881, %v1879
        %v1996 = vpack.c.bf16 %v1882, %v1880
        %v1997 = vpack.c.bf16 %v1885, %v1883
        %v1998 = vpack.c.bf16 %v1886, %v1884
        %v1999 = vpack.c.bf16 %v1889, %v1887
        %v2000 = vpack.c.bf16 %v1890, %v1888
        %v2001 = vpack.c.bf16 %v1893, %v1891
        %v2002 = vpack.c.bf16 %v1894, %v1892
        %v2003 = vpack.c.bf16 %v1897, %v1895
        %v2004 = vpack.c.bf16 %v1898, %v1896
        %v2005 = vpack.c.bf16 %v1901, %v1899
        %v2006 = vpack.c.bf16 %v1902, %v1900
        %v2007 = vpack.c.bf16 %v1905, %v1903
        %v2008 = vpack.c.bf16 %v1906, %v1904
        %v2009 = vpack.c.bf16 %v1909, %v1907
        %v2010 = vpack.c.bf16 %v1910, %v1908
        %v2011 = vpack.c.bf16 %v1913, %v1911
        %v2012 = vpack.c.bf16 %v1914, %v1912
        %v2013 = vpack.c.bf16 %v1917, %v1915
        %v2014 = vpack.c.bf16 %v1918, %v1916
        %v2015 = vpack.c.bf16 %v1921, %v1919
        %v2016 = vpack.c.bf16 %v1922, %v1920
        %v2017 = vpack.c.bf16 %v1925, %v1923
        %v2018 = vpack.c.bf16 %v1926, %v1924
        %v2019 = vpack.c.bf16 %v1929, %v1927
        %v2020 = vpack.c.bf16 %v1930, %v1928
        %v2021 = vpack.c.bf16 %v1933, %v1931
        %v2022 = vpack.c.bf16 %v1934, %v1932
        %v2023 = vpack.c.bf16 %v1937, %v1935
        %v2024 = vpack.c.bf16 %v1938, %v1936
        %v2025 = vpack.c.bf16 %v1941, %v1939
        %v2026 = vpack.c.bf16 %v1942, %v1940
        %v2027 = vpack.c.bf16 %v1945, %v1943
        %v2028 = vpack.c.bf16 %v1946, %v1944
        %v2029 = vpack.c.bf16 %v1949, %v1947
        %v2030 = vpack.c.bf16 %v1950, %v1948
        %v2031 = vpack.c.bf16 %v1953, %v1951
        %v2032 = vpack.c.bf16 %v1954, %v1952
        %v2033 = vpack.c.bf16 %v1957, %v1955
        %v2034 = vpack.c.bf16 %v1958, %v1956
        %v2035 = vpack.c.bf16 %v1961, %v1959
        %v2036 = vpack.c.bf16 %v1962, %v1960
        %v2037 = vpack.c.bf16 %v1965, %v1963
        %v2038 = vpack.c.bf16 %v1966, %v1964
        %v2039 = vpack.c.bf16 %v1969, %v1967
        %v2040 = vpack.c.bf16 %v1970, %v1968
        %v2041 = vpack.c.bf16 %v1973, %v1971
        %v2042 = vpack.c.bf16 %v1974, %v1972
        %v2043 = vpack.c.bf16 %v1977, %v1975
        %v2044 = vpack.c.bf16 %v1978, %v1976
        %v2045 = vpack.c.bf16 %v1981, %v1979
        %v2046 = vpack.c.bf16 %v1982, %v1980
        %v2047 = vld [vmem:[#allocation8] sm:$0xf]
        %v2048 = vld [vmem:[#allocation8 + $0x4] sm:$0xf]
        %v2049 = vld [vmem:[#allocation8 + $0x8] sm:$0xf]
        %v2050 = vld [vmem:[#allocation8 + $0xc] sm:$0xf]
        %v2051 = vld [vmem:[#allocation8 + $0x10] sm:$0xf]
        %v2052 = vld [vmem:[#allocation8 + $0x14] sm:$0xf]
        %v2053 = vld [vmem:[#allocation8 + $0x18] sm:$0xf]
        %v2054 = vld [vmem:[#allocation8 + $0x1c] sm:$0xf]
        %v2055 = vld [vmem:[#allocation8 + $0x20] sm:$0xf]
        %v2056 = vld [vmem:[#allocation8 + $0x24] sm:$0xf]
        %v2057 = vld [vmem:[#allocation8 + $0x28] sm:$0xf]
        %v2058 = vld [vmem:[#allocation8 + $0x2c] sm:$0xf]
        %v2059 = vld [vmem:[#allocation8 + $0x30] sm:$0xf]
        %v2060 = vld [vmem:[#allocation8 + $0x34] sm:$0xf]
        %v2061 = vld [vmem:[#allocation8 + $0x38] sm:$0xf]
        %v2062 = vld [vmem:[#allocation8 + $0x3c] sm:$0xf]
        %v2063 = vld [vmem:[#allocation8 + $0x40] sm:$0xf]
        %v2064 = vld [vmem:[#allocation8 + $0x44] sm:$0xf]
        %v2065 = vld [vmem:[#allocation8 + $0x48] sm:$0xf]
        %v2066 = vld [vmem:[#allocation8 + $0x4c] sm:$0xf]
        %v2067 = vld [vmem:[#allocation8 + $0x50] sm:$0xf]
        %v2068 = vld [vmem:[#allocation8 + $0x54] sm:$0xf]
        %v2069 = vld [vmem:[#allocation8 + $0x58] sm:$0xf]
        %v2070 = vld [vmem:[#allocation8 + $0x5c] sm:$0xf]
        %v2071 = vld [vmem:[#allocation8 + $0x60] sm:$0xf]
        %v2072 = vld [vmem:[#allocation8 + $0x64] sm:$0xf]
        %v2073 = vld [vmem:[#allocation8 + $0x68] sm:$0xf]
        %v2074 = vld [vmem:[#allocation8 + $0x6c] sm:$0xf]
        %v2075 = vld [vmem:[#allocation8 + $0x70] sm:$0xf]
        %v2076 = vld [vmem:[#allocation8 + $0x74] sm:$0xf]
        %v2077 = vld [vmem:[#allocation8 + $0x78] sm:$0xf]
        %v2078 = vld [vmem:[#allocation8 + $0x7c] sm:$0xf]
        %v2079 = vld [vmem:[%s4] sm:$0x1]
        %v2081 = vperm.slane %v2079, 0
        %v2115 = vunpack.c.l.b16 %v2047
        %v2116 = vunpack.c.l.b16 %v2048
        %v2117 = vunpack.c.l.b16 %v2049
        %v2118 = vunpack.c.l.b16 %v2050
        %v2119 = vunpack.c.l.b16 %v2051
        %v2120 = vunpack.c.l.b16 %v2052
        %v2121 = vunpack.c.l.b16 %v2053
        %v2122 = vunpack.c.l.b16 %v2054
        %v2123 = vunpack.c.l.b16 %v2055
        %v2124 = vunpack.c.l.b16 %v2056
        %v2125 = vunpack.c.l.b16 %v2057
        %v2126 = vunpack.c.l.b16 %v2058
        %v2127 = vunpack.c.l.b16 %v2059
        %v2128 = vunpack.c.l.b16 %v2060
        %v2129 = vunpack.c.l.b16 %v2061
        %v2130 = vunpack.c.l.b16 %v2062
        %v2131 = vunpack.c.l.b16 %v2063
        %v2132 = vunpack.c.l.b16 %v2064
        %v2133 = vunpack.c.l.b16 %v2065
        %v2134 = vunpack.c.l.b16 %v2066
        %v2135 = vunpack.c.l.b16 %v2067
        %v2136 = vunpack.c.l.b16 %v2068
        %v2137 = vunpack.c.l.b16 %v2069
        %v2138 = vunpack.c.l.b16 %v2070
        %v2139 = vunpack.c.l.b16 %v2071
        %v2140 = vunpack.c.l.b16 %v2072
        %v2141 = vunpack.c.l.b16 %v2073
        %v2142 = vunpack.c.l.b16 %v2074
        %v2143 = vunpack.c.l.b16 %v2075
        %v2144 = vunpack.c.l.b16 %v2076
        %v2145 = vunpack.c.l.b16 %v2077
        %v2146 = vunpack.c.l.b16 %v2078
        %v2147 = vpack.c.b16 %v2116, %v2115
        %v2148 = vpack.c.b16 %v2118, %v2117
        %v2149 = vpack.c.b16 %v2120, %v2119
        %v2150 = vpack.c.b16 %v2122, %v2121
        %v2151 = vpack.c.b16 %v2124, %v2123
        %v2152 = vpack.c.b16 %v2126, %v2125
        %v2153 = vpack.c.b16 %v2128, %v2127
        %v2154 = vpack.c.b16 %v2130, %v2129
        %v2155 = vpack.c.b16 %v2132, %v2131
        %v2156 = vpack.c.b16 %v2134, %v2133
        %v2157 = vpack.c.b16 %v2136, %v2135
        %v2158 = vpack.c.b16 %v2138, %v2137
        %v2159 = vpack.c.b16 %v2140, %v2139
        %v2160 = vpack.c.b16 %v2142, %v2141
        %v2161 = vpack.c.b16 %v2144, %v2143
        %v2162 = vpack.c.b16 %v2146, %v2145
        %2179 = vmatpush.bf16.msra.mxu0 %v2154
        %2180 = vmatpush.bf16.msra.mxu0 %v2153
        %2181 = vmatpush.bf16.msra.mxu0 %v2152
        %2182 = vmatpush.bf16.msra.mxu0 %v2151
        %2183 = vmatpush.bf16.msra.mxu0 %v2150
        %2184 = vmatpush.bf16.msra.mxu0 %v2149
        %2185 = vmatpush.bf16.msra.mxu0 %v2148
        %2186 = vmatpush.bf16.msra.mxu0 %v2147
        %2187 = vmatmul.bf16.gmra.mxu0 %v1983
        %v2188 = vpop.f32.mrf.mxu0
        %v2189 = vadd.f32 %v2081, %v2188
        %v2190 = vpop.f32.mrf.mxu0
        %v2191 = vadd.f32 %v2081, %v2190
        %2192 = vmatmul.bf16.gmra.mxu0 %v1985
        %v2193 = vpop.f32.mrf.mxu0
        %v2194 = vadd.f32 %v2081, %v2193
        %v2195 = vpop.f32.mrf.mxu0
        %v2196 = vadd.f32 %v2081, %v2195
        %2197 = vmatmul.bf16.gmra.mxu0 %v1987
        %v2198 = vpop.f32.mrf.mxu0
        %v2199 = vadd.f32 %v2081, %v2198
        %v2200 = vpop.f32.mrf.mxu0
        %v2201 = vadd.f32 %v2081, %v2200
        %2202 = vmatmul.bf16.gmra.mxu0 %v1989
        %v2203 = vpop.f32.mrf.mxu0
        %v2204 = vadd.f32 %v2081, %v2203
        %v2205 = vpop.f32.mrf.mxu0
        %v2206 = vadd.f32 %v2081, %v2205
        %2207 = vmatmul.bf16.gmra.mxu0 %v1991
        %v2208 = vpop.f32.mrf.mxu0
        %v2209 = vadd.f32 %v2081, %v2208
        %v2210 = vpop.f32.mrf.mxu0
        %v2211 = vadd.f32 %v2081, %v2210
        %2212 = vmatmul.bf16.gmra.mxu0 %v1993
        %v2213 = vpop.f32.mrf.mxu0
        %v2214 = vadd.f32 %v2081, %v2213
        %v2215 = vpop.f32.mrf.mxu0
        %v2216 = vadd.f32 %v2081, %v2215
        %2217 = vmatmul.bf16.gmra.mxu0 %v1995
        %v2218 = vpop.f32.mrf.mxu0
        %v2219 = vadd.f32 %v2081, %v2218
        %v2220 = vpop.f32.mrf.mxu0
        %v2221 = vadd.f32 %v2081, %v2220
        %2222 = vmatmul.bf16.gmra.mxu0 %v1997
        %v2223 = vpop.f32.mrf.mxu0
        %v2224 = vadd.f32 %v2081, %v2223
        %v2225 = vpop.f32.mrf.mxu0
        %v2226 = vadd.f32 %v2081, %v2225
        %2227 = vmatmul.bf16.gmra.mxu0 %v1999
        %v2228 = vpop.f32.mrf.mxu0
        %v2229 = vadd.f32 %v2081, %v2228
        %v2230 = vpop.f32.mrf.mxu0
        %v2231 = vadd.f32 %v2081, %v2230
        %2232 = vmatmul.bf16.gmra.mxu0 %v2001
        %v2233 = vpop.f32.mrf.mxu0
        %v2234 = vadd.f32 %v2081, %v2233
        %v2235 = vpop.f32.mrf.mxu0
        %v2236 = vadd.f32 %v2081, %v2235
        %2237 = vmatmul.bf16.gmra.mxu0 %v2003
        %v2238 = vpop.f32.mrf.mxu0
        %v2239 = vadd.f32 %v2081, %v2238
        %v2240 = vpop.f32.mrf.mxu0
        %v2241 = vadd.f32 %v2081, %v2240
        %2242 = vmatmul.bf16.gmra.mxu0 %v2005
        %v2243 = vpop.f32.mrf.mxu0
        %v2244 = vadd.f32 %v2081, %v2243
        %v2245 = vpop.f32.mrf.mxu0
        %v2246 = vadd.f32 %v2081, %v2245
        %2247 = vmatmul.bf16.gmra.mxu0 %v2007
        %v2248 = vpop.f32.mrf.mxu0
        %v2249 = vadd.f32 %v2081, %v2248
        %v2250 = vpop.f32.mrf.mxu0
        %v2251 = vadd.f32 %v2081, %v2250
        %2252 = vmatmul.bf16.gmra.mxu0 %v2009
        %v2253 = vpop.f32.mrf.mxu0
        %v2254 = vadd.f32 %v2081, %v2253
        %v2255 = vpop.f32.mrf.mxu0
        %v2256 = vadd.f32 %v2081, %v2255
        %2257 = vmatmul.bf16.gmra.mxu0 %v2011
        %v2258 = vpop.f32.mrf.mxu0
        %v2259 = vadd.f32 %v2081, %v2258
        %v2260 = vpop.f32.mrf.mxu0
        %v2261 = vadd.f32 %v2081, %v2260
        %2262 = vmatmul.bf16.gmra.mxu0 %v2013
        %v2263 = vpop.f32.mrf.mxu0
        %v2264 = vadd.f32 %v2081, %v2263
        %v2265 = vpop.f32.mrf.mxu0
        %v2266 = vadd.f32 %v2081, %v2265
        %2267 = vmatmul.bf16.gmra.mxu0 %v2015
        %v2268 = vpop.f32.mrf.mxu0
        %v2269 = vadd.f32 %v2081, %v2268
        %v2270 = vpop.f32.mrf.mxu0
        %v2271 = vadd.f32 %v2081, %v2270
        %2272 = vmatmul.bf16.gmra.mxu0 %v2017
        %v2273 = vpop.f32.mrf.mxu0
        %v2274 = vadd.f32 %v2081, %v2273
        %v2275 = vpop.f32.mrf.mxu0
        %v2276 = vadd.f32 %v2081, %v2275
        %2277 = vmatmul.bf16.gmra.mxu0 %v2019
        %v2278 = vpop.f32.mrf.mxu0
        %v2279 = vadd.f32 %v2081, %v2278
        %v2280 = vpop.f32.mrf.mxu0
        %v2281 = vadd.f32 %v2081, %v2280
        %2282 = vmatmul.bf16.gmra.mxu0 %v2021
        %v2283 = vpop.f32.mrf.mxu0
        %v2284 = vadd.f32 %v2081, %v2283
        %v2285 = vpop.f32.mrf.mxu0
        %v2286 = vadd.f32 %v2081, %v2285
        %2287 = vmatmul.bf16.gmra.mxu0 %v2023
        %v2288 = vpop.f32.mrf.mxu0
        %v2289 = vadd.f32 %v2081, %v2288
        %v2290 = vpop.f32.mrf.mxu0
        %v2291 = vadd.f32 %v2081, %v2290
        %2292 = vmatmul.bf16.gmra.mxu0 %v2025
        %v2293 = vpop.f32.mrf.mxu0
        %v2294 = vadd.f32 %v2081, %v2293
        %v2295 = vpop.f32.mrf.mxu0
        %v2296 = vadd.f32 %v2081, %v2295
        %2297 = vmatmul.bf16.gmra.mxu0 %v2027
        %v2298 = vpop.f32.mrf.mxu0
        %v2299 = vadd.f32 %v2081, %v2298
        %v2300 = vpop.f32.mrf.mxu0
        %v2301 = vadd.f32 %v2081, %v2300
        %2302 = vmatmul.bf16.gmra.mxu0 %v2029
        %v2303 = vpop.f32.mrf.mxu0
        %v2304 = vadd.f32 %v2081, %v2303
        %v2305 = vpop.f32.mrf.mxu0
        %v2306 = vadd.f32 %v2081, %v2305
        %2307 = vmatmul.bf16.gmra.mxu0 %v2031
        %v2308 = vpop.f32.mrf.mxu0
        %v2309 = vadd.f32 %v2081, %v2308
        %v2310 = vpop.f32.mrf.mxu0
        %v2311 = vadd.f32 %v2081, %v2310
        %2312 = vmatmul.bf16.gmra.mxu0 %v2033
        %v2313 = vpop.f32.mrf.mxu0
        %v2314 = vadd.f32 %v2081, %v2313
        %v2315 = vpop.f32.mrf.mxu0
        %v2316 = vadd.f32 %v2081, %v2315
        %2317 = vmatmul.bf16.gmra.mxu0 %v2035
        %v2318 = vpop.f32.mrf.mxu0
        %v2319 = vadd.f32 %v2081, %v2318
        %v2320 = vpop.f32.mrf.mxu0
        %v2321 = vadd.f32 %v2081, %v2320
        %2322 = vmatmul.bf16.gmra.mxu0 %v2037
        %v2323 = vpop.f32.mrf.mxu0
        %v2324 = vadd.f32 %v2081, %v2323
        %v2325 = vpop.f32.mrf.mxu0
        %v2326 = vadd.f32 %v2081, %v2325
        %2327 = vmatmul.bf16.gmra.mxu0 %v2039
        %v2328 = vpop.f32.mrf.mxu0
        %v2329 = vadd.f32 %v2081, %v2328
        %v2330 = vpop.f32.mrf.mxu0
        %v2331 = vadd.f32 %v2081, %v2330
        %2332 = vmatmul.bf16.gmra.mxu0 %v2041
        %v2333 = vpop.f32.mrf.mxu0
        %v2334 = vadd.f32 %v2081, %v2333
        %v2335 = vpop.f32.mrf.mxu0
        %v2336 = vadd.f32 %v2081, %v2335
        %2337 = vmatmul.bf16.gmra.mxu0 %v2043
        %v2338 = vpop.f32.mrf.mxu0
        %v2339 = vadd.f32 %v2081, %v2338
        %v2340 = vpop.f32.mrf.mxu0
        %v2341 = vadd.f32 %v2081, %v2340
        %2342 = vmatmul.bf16.gmra.mxu0 %v2045
        %v2343 = vpop.f32.mrf.mxu0
        %v2344 = vadd.f32 %v2081, %v2343
        %v2345 = vpop.f32.mrf.mxu0
        %v2346 = vadd.f32 %v2081, %v2345
        %2347 = vdwg.mxu0
        %2348 = vmatpush.bf16.msra.mxu0 %v2162
        %2349 = vmatpush.bf16.msra.mxu0 %v2161
        %2350 = vmatpush.bf16.msra.mxu0 %v2160
        %2351 = vmatpush.bf16.msra.mxu0 %v2159
        %2352 = vmatpush.bf16.msra.mxu0 %v2158
        %2353 = vmatpush.bf16.msra.mxu0 %v2157
        %2354 = vmatpush.bf16.msra.mxu0 %v2156
        %2355 = vmatpush.bf16.msra.mxu0 %v2155
        %2356 = vmatmul.bf16.gmra.mxu0 %v1984
        %v2357 = vpop.f32.mrf.mxu0
        %v2358 = vadd.f32 %v2189, %v2357
        %v2359 = vpop.f32.mrf.mxu0
        %v2360 = vadd.f32 %v2191, %v2359
        %2361 = vmatmul.bf16.gmra.mxu0 %v1986
        %v2362 = vpop.f32.mrf.mxu0
        %v2363 = vadd.f32 %v2194, %v2362
        %v2364 = vpop.f32.mrf.mxu0
        %v2365 = vadd.f32 %v2196, %v2364
        %2366 = vmatmul.bf16.gmra.mxu0 %v1988
        %v2367 = vpop.f32.mrf.mxu0
        %v2368 = vadd.f32 %v2199, %v2367
        %v2369 = vpop.f32.mrf.mxu0
        %v2370 = vadd.f32 %v2201, %v2369
        %2371 = vmatmul.bf16.gmra.mxu0 %v1990
        %v2372 = vpop.f32.mrf.mxu0
        %v2373 = vadd.f32 %v2204, %v2372
        %v2374 = vpop.f32.mrf.mxu0
        %v2375 = vadd.f32 %v2206, %v2374
        %2376 = vmatmul.bf16.gmra.mxu0 %v1992
        %v2377 = vpop.f32.mrf.mxu0
        %v2378 = vadd.f32 %v2209, %v2377
        %v2379 = vpop.f32.mrf.mxu0
        %v2380 = vadd.f32 %v2211, %v2379
        %2381 = vmatmul.bf16.gmra.mxu0 %v1994
        %v2382 = vpop.f32.mrf.mxu0
        %v2383 = vadd.f32 %v2214, %v2382
        %v2384 = vpop.f32.mrf.mxu0
        %v2385 = vadd.f32 %v2216, %v2384
        %2386 = vmatmul.bf16.gmra.mxu0 %v1996
        %v2387 = vpop.f32.mrf.mxu0
        %v2388 = vadd.f32 %v2219, %v2387
        %v2389 = vpop.f32.mrf.mxu0
        %v2390 = vadd.f32 %v2221, %v2389
        %2391 = vmatmul.bf16.gmra.mxu0 %v1998
        %v2392 = vpop.f32.mrf.mxu0
        %v2393 = vadd.f32 %v2224, %v2392
        %v2394 = vpop.f32.mrf.mxu0
        %v2395 = vadd.f32 %v2226, %v2394
        %2396 = vmatmul.bf16.gmra.mxu0 %v2000
        %v2397 = vpop.f32.mrf.mxu0
        %v2398 = vadd.f32 %v2229, %v2397
        %v2399 = vpop.f32.mrf.mxu0
        %v2400 = vadd.f32 %v2231, %v2399
        %2401 = vmatmul.bf16.gmra.mxu0 %v2002
        %v2402 = vpop.f32.mrf.mxu0
        %v2403 = vadd.f32 %v2234, %v2402
        %v2404 = vpop.f32.mrf.mxu0
        %v2405 = vadd.f32 %v2236, %v2404
        %2406 = vmatmul.bf16.gmra.mxu0 %v2004
        %v2407 = vpop.f32.mrf.mxu0
        %v2408 = vadd.f32 %v2239, %v2407
        %v2409 = vpop.f32.mrf.mxu0
        %v2410 = vadd.f32 %v2241, %v2409
        %2411 = vmatmul.bf16.gmra.mxu0 %v2006
        %v2412 = vpop.f32.mrf.mxu0
        %v2413 = vadd.f32 %v2244, %v2412
        %v2414 = vpop.f32.mrf.mxu0
        %v2415 = vadd.f32 %v2246, %v2414
        %2416 = vmatmul.bf16.gmra.mxu0 %v2008
        %v2417 = vpop.f32.mrf.mxu0
        %v2418 = vadd.f32 %v2249, %v2417
        %v2419 = vpop.f32.mrf.mxu0
        %v2420 = vadd.f32 %v2251, %v2419
        %2421 = vmatmul.bf16.gmra.mxu0 %v2010
        %v2422 = vpop.f32.mrf.mxu0
        %v2423 = vadd.f32 %v2254, %v2422
        %v2424 = vpop.f32.mrf.mxu0
        %v2425 = vadd.f32 %v2256, %v2424
        %2426 = vmatmul.bf16.gmra.mxu0 %v2012
        %v2427 = vpop.f32.mrf.mxu0
        %v2428 = vadd.f32 %v2259, %v2427
        %v2429 = vpop.f32.mrf.mxu0
        %v2430 = vadd.f32 %v2261, %v2429
        %2431 = vmatmul.bf16.gmra.mxu0 %v2014
        %v2432 = vpop.f32.mrf.mxu0
        %v2433 = vadd.f32 %v2264, %v2432
        %v2434 = vpop.f32.mrf.mxu0
        %v2435 = vadd.f32 %v2266, %v2434
        %2436 = vmatmul.bf16.gmra.mxu0 %v2016
        %v2437 = vpop.f32.mrf.mxu0
        %v2438 = vadd.f32 %v2269, %v2437
        %v2439 = vpop.f32.mrf.mxu0
        %v2440 = vadd.f32 %v2271, %v2439
        %2441 = vmatmul.bf16.gmra.mxu0 %v2018
        %v2442 = vpop.f32.mrf.mxu0
        %v2443 = vadd.f32 %v2274, %v2442
        %v2444 = vpop.f32.mrf.mxu0
        %v2445 = vadd.f32 %v2276, %v2444
        %2446 = vmatmul.bf16.gmra.mxu0 %v2020
        %v2447 = vpop.f32.mrf.mxu0
        %v2448 = vadd.f32 %v2279, %v2447
        %v2449 = vpop.f32.mrf.mxu0
        %v2450 = vadd.f32 %v2281, %v2449
        %2451 = vmatmul.bf16.gmra.mxu0 %v2022
        %v2452 = vpop.f32.mrf.mxu0
        %v2453 = vadd.f32 %v2284, %v2452
        %v2454 = vpop.f32.mrf.mxu0
        %v2455 = vadd.f32 %v2286, %v2454
        %2456 = vmatmul.bf16.gmra.mxu0 %v2024
        %v2457 = vpop.f32.mrf.mxu0
        %v2458 = vadd.f32 %v2289, %v2457
        %v2459 = vpop.f32.mrf.mxu0
        %v2460 = vadd.f32 %v2291, %v2459
        %2461 = vmatmul.bf16.gmra.mxu0 %v2026
        %v2462 = vpop.f32.mrf.mxu0
        %v2463 = vadd.f32 %v2294, %v2462
        %v2464 = vpop.f32.mrf.mxu0
        %v2465 = vadd.f32 %v2296, %v2464
        %2466 = vmatmul.bf16.gmra.mxu0 %v2028
        %v2467 = vpop.f32.mrf.mxu0
        %v2468 = vadd.f32 %v2299, %v2467
        %v2469 = vpop.f32.mrf.mxu0
        %v2470 = vadd.f32 %v2301, %v2469
        %2471 = vmatmul.bf16.gmra.mxu0 %v2030
        %v2472 = vpop.f32.mrf.mxu0
        %v2473 = vadd.f32 %v2304, %v2472
        %v2474 = vpop.f32.mrf.mxu0
        %v2475 = vadd.f32 %v2306, %v2474
        %2476 = vmatmul.bf16.gmra.mxu0 %v2032
        %v2477 = vpop.f32.mrf.mxu0
        %v2478 = vadd.f32 %v2309, %v2477
        %v2479 = vpop.f32.mrf.mxu0
        %v2480 = vadd.f32 %v2311, %v2479
        %2481 = vmatmul.bf16.gmra.mxu0 %v2034
        %v2482 = vpop.f32.mrf.mxu0
        %v2483 = vadd.f32 %v2314, %v2482
        %v2484 = vpop.f32.mrf.mxu0
        %v2485 = vadd.f32 %v2316, %v2484
        %2486 = vmatmul.bf16.gmra.mxu0 %v2036
        %v2487 = vpop.f32.mrf.mxu0
        %v2488 = vadd.f32 %v2319, %v2487
        %v2489 = vpop.f32.mrf.mxu0
        %v2490 = vadd.f32 %v2321, %v2489
        %2491 = vmatmul.bf16.gmra.mxu0 %v2038
        %v2492 = vpop.f32.mrf.mxu0
        %v2493 = vadd.f32 %v2324, %v2492
        %v2494 = vpop.f32.mrf.mxu0
        %v2495 = vadd.f32 %v2326, %v2494
        %2496 = vmatmul.bf16.gmra.mxu0 %v2040
        %v2497 = vpop.f32.mrf.mxu0
        %v2498 = vadd.f32 %v2329, %v2497
        %v2499 = vpop.f32.mrf.mxu0
        %v2500 = vadd.f32 %v2331, %v2499
        %2501 = vmatmul.bf16.gmra.mxu0 %v2042
        %v2502 = vpop.f32.mrf.mxu0
        %v2503 = vadd.f32 %v2334, %v2502
        %v2504 = vpop.f32.mrf.mxu0
        %v2505 = vadd.f32 %v2336, %v2504
        %2506 = vmatmul.bf16.gmra.mxu0 %v2044
        %v2507 = vpop.f32.mrf.mxu0
        %v2508 = vadd.f32 %v2339, %v2507
        %v2509 = vpop.f32.mrf.mxu0
        %v2510 = vadd.f32 %v2341, %v2509
        %2511 = vmatmul.bf16.gmra.mxu0 %v2046
        %v2512 = vpop.f32.mrf.mxu0
        %v2513 = vadd.f32 %v2344, %v2512
        %v2514 = vpop.f32.mrf.mxu0
        %v2515 = vadd.f32 %v2346, %v2514
        %2516 = vdwg.mxu0
        %v2517 = vadd.f32 %v2358, %v295
        %v2518 = vadd.f32 %v2360, %v296
        %v2519 = vadd.f32 %v2363, %v297
        %v2520 = vadd.f32 %v2365, %v298
        %v2521 = vadd.f32 %v2368, %v299
        %v2522 = vadd.f32 %v2370, %v300
        %v2523 = vadd.f32 %v2373, %v301
        %v2524 = vadd.f32 %v2375, %v302
        %v2525 = vadd.f32 %v2378, %v303
        %v2526 = vadd.f32 %v2380, %v304
        %v2527 = vadd.f32 %v2383, %v305
        %v2528 = vadd.f32 %v2385, %v306
        %v2529 = vadd.f32 %v2388, %v307
        %v2530 = vadd.f32 %v2390, %v308
        %v2531 = vadd.f32 %v2393, %v309
        %v2532 = vadd.f32 %v2395, %v310
        %v2533 = vadd.f32 %v2398, %v311
        %v2534 = vadd.f32 %v2400, %v312
        %v2535 = vadd.f32 %v2403, %v313
        %v2536 = vadd.f32 %v2405, %v314
        %v2537 = vadd.f32 %v2408, %v315
        %v2538 = vadd.f32 %v2410, %v316
        %v2539 = vadd.f32 %v2413, %v317
        %v2540 = vadd.f32 %v2415, %v318
        %v2541 = vadd.f32 %v2418, %v319
        %v2542 = vadd.f32 %v2420, %v320
        %v2543 = vadd.f32 %v2423, %v321
        %v2544 = vadd.f32 %v2425, %v322
        %v2545 = vadd.f32 %v2428, %v323
        %v2546 = vadd.f32 %v2430, %v324
        %v2547 = vadd.f32 %v2433, %v325
        %v2548 = vadd.f32 %v2435, %v326
        %v2549 = vadd.f32 %v2438, %v327
        %v2550 = vadd.f32 %v2440, %v328
        %v2551 = vadd.f32 %v2443, %v329
        %v2552 = vadd.f32 %v2445, %v330
        %v2553 = vadd.f32 %v2448, %v331
        %v2554 = vadd.f32 %v2450, %v332
        %v2555 = vadd.f32 %v2453, %v333
        %v2556 = vadd.f32 %v2455, %v334
        %v2557 = vadd.f32 %v2458, %v335
        %v2558 = vadd.f32 %v2460, %v336
        %v2559 = vadd.f32 %v2463, %v337
        %v2560 = vadd.f32 %v2465, %v338
        %v2561 = vadd.f32 %v2468, %v339
        %v2562 = vadd.f32 %v2470, %v340
        %v2563 = vadd.f32 %v2473, %v341
        %v2564 = vadd.f32 %v2475, %v342
        %v2565 = vadd.f32 %v2478, %v343
        %v2566 = vadd.f32 %v2480, %v344
        %v2567 = vadd.f32 %v2483, %v345
        %v2568 = vadd.f32 %v2485, %v346
        %v2569 = vadd.f32 %v2488, %v347
        %v2570 = vadd.f32 %v2490, %v348
        %v2571 = vadd.f32 %v2493, %v349
        %v2572 = vadd.f32 %v2495, %v350
        %v2573 = vadd.f32 %v2498, %v351
        %v2574 = vadd.f32 %v2500, %v352
        %v2575 = vadd.f32 %v2503, %v353
        %v2576 = vadd.f32 %v2505, %v354
        %v2577 = vadd.f32 %v2508, %v355
        %v2578 = vadd.f32 %v2510, %v356
        %v2579 = vadd.f32 %v2513, %v357
        %v2580 = vadd.f32 %v2515, %v358
        %2581 = vst [vmem:[%s292] sm:$0xff] %v2517
        %2582 = vst [vmem:[%s292 + $0x8] sm:$0xff] %v2518
        %2583 = vst [vmem:[%s292 + $0x10] sm:$0xff] %v2519
        %2584 = vst [vmem:[%s292 + $0x18] sm:$0xff] %v2520
        %2585 = vst [vmem:[%s292 + $0x20] sm:$0xff] %v2521
        %2586 = vst [vmem:[%s292 + $0x28] sm:$0xff] %v2522
        %2587 = vst [vmem:[%s292 + $0x30] sm:$0xff] %v2523
        %2588 = vst [vmem:[%s292 + $0x38] sm:$0xff] %v2524
        %2589 = vst [vmem:[%s292 + $0x40] sm:$0xff] %v2525
        %2590 = vst [vmem:[%s292 + $0x48] sm:$0xff] %v2526
        %2591 = vst [vmem:[%s292 + $0x50] sm:$0xff] %v2527
        %2592 = vst [vmem:[%s292 + $0x58] sm:$0xff] %v2528
        %2593 = vst [vmem:[%s292 + $0x60] sm:$0xff] %v2529
        %2594 = vst [vmem:[%s292 + $0x68] sm:$0xff] %v2530
        %2595 = vst [vmem:[%s292 + $0x70] sm:$0xff] %v2531
        %2596 = vst [vmem:[%s292 + $0x78] sm:$0xff] %v2532
        %2597 = vst [vmem:[%s292 + $0x80] sm:$0xff] %v2533
        %2598 = vst [vmem:[%s292 + $0x88] sm:$0xff] %v2534
        %2599 = vst [vmem:[%s292 + $0x90] sm:$0xff] %v2535
        %2600 = vst [vmem:[%s292 + $0x98] sm:$0xff] %v2536
        %2601 = vst [vmem:[%s292 + $0xa0] sm:$0xff] %v2537
        %2602 = vst [vmem:[%s292 + $0xa8] sm:$0xff] %v2538
        %2603 = vst [vmem:[%s292 + $0xb0] sm:$0xff] %v2539
        %2604 = vst [vmem:[%s292 + $0xb8] sm:$0xff] %v2540
        %2605 = vst [vmem:[%s292 + $0xc0] sm:$0xff] %v2541
        %2606 = vst [vmem:[%s292 + $0xc8] sm:$0xff] %v2542
        %2607 = vst [vmem:[%s292 + $0xd0] sm:$0xff] %v2543
        %2608 = vst [vmem:[%s292 + $0xd8] sm:$0xff] %v2544
        %2609 = vst [vmem:[%s292 + $0xe0] sm:$0xff] %v2545
        %2610 = vst [vmem:[%s292 + $0xe8] sm:$0xff] %v2546
        %2611 = vst [vmem:[%s292 + $0xf0] sm:$0xff] %v2547
        %2612 = vst [vmem:[%s292 + $0xf8] sm:$0xff] %v2548
        %2613 = vst [vmem:[%s292 + $0x100] sm:$0xff] %v2549
        %2614 = vst [vmem:[%s292 + $0x108] sm:$0xff] %v2550
        %2615 = vst [vmem:[%s292 + $0x110] sm:$0xff] %v2551
        %2616 = vst [vmem:[%s292 + $0x118] sm:$0xff] %v2552
        %2617 = vst [vmem:[%s292 + $0x120] sm:$0xff] %v2553
        %2618 = vst [vmem:[%s292 + $0x128] sm:$0xff] %v2554
        %2619 = vst [vmem:[%s292 + $0x130] sm:$0xff] %v2555
        %2620 = vst [vmem:[%s292 + $0x138] sm:$0xff] %v2556
        %2621 = vst [vmem:[%s292 + $0x140] sm:$0xff] %v2557
        %2622 = vst [vmem:[%s292 + $0x148] sm:$0xff] %v2558
        %2623 = vst [vmem:[%s292 + $0x150] sm:$0xff] %v2559
        %2624 = vst [vmem:[%s292 + $0x158] sm:$0xff] %v2560
        %2625 = vst [vmem:[%s292 + $0x160] sm:$0xff] %v2561
        %2626 = vst [vmem:[%s292 + $0x168] sm:$0xff] %v2562
        %2627 = vst [vmem:[%s292 + $0x170] sm:$0xff] %v2563
        %2628 = vst [vmem:[%s292 + $0x178] sm:$0xff] %v2564
        %2629 = vst [vmem:[%s292 + $0x180] sm:$0xff] %v2565
        %2630 = vst [vmem:[%s292 + $0x188] sm:$0xff] %v2566
        %2631 = vst [vmem:[%s292 + $0x190] sm:$0xff] %v2567
        %2632 = vst [vmem:[%s292 + $0x198] sm:$0xff] %v2568
        %2633 = vst [vmem:[%s292 + $0x1a0] sm:$0xff] %v2569
        %2634 = vst [vmem:[%s292 + $0x1a8] sm:$0xff] %v2570
        %2635 = vst [vmem:[%s292 + $0x1b0] sm:$0xff] %v2571
        %2636 = vst [vmem:[%s292 + $0x1b8] sm:$0xff] %v2572
        %2637 = vst [vmem:[%s292 + $0x1c0] sm:$0xff] %v2573
        %2638 = vst [vmem:[%s292 + $0x1c8] sm:$0xff] %v2574
        %2639 = vst [vmem:[%s292 + $0x1d0] sm:$0xff] %v2575
        %2640 = vst [vmem:[%s292 + $0x1d8] sm:$0xff] %v2576
        %2641 = vst [vmem:[%s292 + $0x1e0] sm:$0xff] %v2577
        %2642 = vst [vmem:[%s292 + $0x1e8] sm:$0xff] %v2578
        %2643 = vst [vmem:[%s292 + $0x1f0] sm:$0xff] %v2579
        %2644 = vst [vmem:[%s292 + $0x1f8] sm:$0xff] %v2580
        %s2645 = sand.u32 %s142, 1
        %s2646 = scalar_lea.sflag [#allocation4], %s2645
        %s2647 = sand.u32 %s142, 1
        %s2648 = smul.addr %s2647, 512
        %s2649 = scalar_lea.vmem [#allocation10], %s2648
        // Predicated region
        $region57: #{tpu_custom_call.1} parent=39 // pred_check
          %p2650 = pneg %p152
        $region58: #{tpu_custom_call.1} parent=39 // pred_check_branch
          %2652 = sbr.rel (%p2650) target = $region60
        $region59: #{tpu_custom_call.1} parent=39 // pred_region
          %s2653 = smul.u32 64, %s24
          %2655 = vsyncadd %s2646, 0
          %s2656 = smul.addr %s2653, 8
          %s2657 = scalar_lea.hbm %s5, %s2656
          %s2658 = sshll.u32 %s2649, 4
          %s2659 = int_to_ptr.vmem [resolvable:$true] %s2658
          %s2660 = sshll.u32 %s2657, 4
          %s2661 = int_to_ptr.hbm [resolvable:$true] %s2660
          %2666 = dma.vmem_to_hbm [thread:$0]  %s2659, 8192, %s2661, %s2646, 128, 128, 8
        $region60: #{tpu_custom_call.1} parent=39 // pred_fallthru
          _
      $region40: #{tpu_custom_call.1} parent=5 // pred_fallthru
        _
      %p2667 = scmp.le.s32.totalorder 2, %s19
      // Predicated region
      $region61: #{tpu_custom_call.1} parent=5 // pred_check
        %p2668 = pneg %p2667
      $region62: #{tpu_custom_call.1} parent=5 // pred_check_branch
        %2670 = sbr.rel (%p2668) target = $region64
      $region63: #{tpu_custom_call.1} parent=5 // pred_region
        %s2671 = ssub.s32 %s19, 2
        // Predicated region
        $region65: #{tpu_custom_call.1} parent=63 // pred_check
          %p2672 = pneg %p158
        $region66: #{tpu_custom_call.1} parent=63 // pred_check_branch
          %2674 = sbr.rel (%p2672) target = $region68
        $region67: #{tpu_custom_call.1} parent=63 // pred_region
          %s2675 = sand.u32 %s143, 1
          %s2676 = scalar_lea.sflag [#allocation4], %s2675
          %s2677 = sand.u32 %s143, 1
          %s2678 = smul.addr %s2677, 512
          %s2679 = scalar_lea.vmem [#allocation10], %s2678
          %2681 = dma.done %s2676, 8192
        $region68: #{tpu_custom_call.1} parent=63 // pred_fallthru
          _
      $region64: #{tpu_custom_call.1} parent=5 // pred_fallthru
        _
    $region6: #{tpu_custom_call.1} parent=1 // loop_footer
      %s23 = sadd.s32 1, %s19
    $region7: #{tpu_custom_call.1} parent=1 // loop_footer_branch
      %18 = sbr.rel target = $region3
    $region8: #{tpu_custom_call.1} parent=1 // loop_exit
      _
    %2682 = vsyncpa [#allocation3], 1
    %s2683 = scalar_lea.sflag [#allocation3], 1
    %2684 = vsyncpa %s2683, 1
    %2685 = vsyncpa [#allocation6], 1
    %2686 = vsyncpa [#allocation9], 1
    %2687 = vsyncpa [#allocation4], 1
    %s2688 = scalar_lea.sflag [#allocation4], 1
    %2689 = vsyncpa %s2688, 1

</llo_original>
